<compile_context>
chip_gen: v7x
topology: tpu7x:2x2x1
jax: 0.10.0
libtpu: 0.0.40
codegen_flags: <defaults>
</compile_context>

<pallas_src>
import functools
import jax
import jax.numpy as jnp
from jax.experimental import pallas as pl
from jax.experimental.pallas import tpu as pltpu

# Module hyper-parameters (globals in the original PyTorch file).
EMBED_DIM = 32
NUM_HEADS = 4
HEAD_SIZE = EMBED_DIM // NUM_HEADS   # 8
SEQ_LEN = 8                          # block_size
BATCH = 2
DROPOUT = 0.0                        # TODO(synk): training-mode dropout (pltpu.prng_*) not wired; eval semantics only.


def _mha_kernel(x_ref, wqkv_ref, wp_ref, bp_ref, bias_ref, o_ref, *,
                num_heads, head_size):
    # Single invocation: the whole (B*T, C) problem is resident in VMEM.
    H, hs = num_heads, head_size
    x = x_ref[...].astype(jnp.bfloat16)                       # (BT, C) bf16 -> native MXU
    BT, C = x.shape

    # Packed QKV projection: one (BT, C) @ (C, 3C) matmul, f32 accumulation.
    # (head_size**-0.5 is already folded into the Wq slab by prepare_mha_params.)
    qkv = jnp.dot(x, wqkv_ref[...], preferred_element_type=jnp.float32)   # (BT, 3C)

    # Split heads: (BT, H, hs) each.
    q = qkv[:, 0 * C:1 * C].reshape(BT, H, hs)
    k = qkv[:, 1 * C:2 * C].reshape(BT, H, hs)
    v = qkv[:, 2 * C:3 * C].reshape(BT, H, hs)

    # Attention scores for all heads: (H, BT, BT); additive block-diagonal causal bias.
    s = jnp.einsum('qhd,khd->hqk',
                   q.astype(jnp.bfloat16), k.astype(jnp.bfloat16),
                   preferred_element_type=jnp.float32)
    s = s + bias_ref[...][None, :, :]

    # Numerically-stable softmax; elementwise math kept in f32 (no bf16 VPU/EUP on v5e).
    m = jnp.max(s, axis=-1, keepdims=True)
    e = jnp.exp(s - m)
    p = e / jnp.sum(e, axis=-1, keepdims=True)

    # Attention-weighted values, heads re-concatenated along the lane axis:
    # (H,BT,BT) x (BT,H,hs) -> (BT,H,hs) -> (BT,C).
    ctx = jnp.einsum('hqk,khd->qhd',
                     p.astype(jnp.bfloat16), v.astype(jnp.bfloat16),
                     preferred_element_type=jnp.float32)
    ctx2 = ctx.reshape(BT, C)

    # Output projection: one (BT,C)@(C,C) matmul (K=32 contraction) + bias.
    out = jnp.dot(ctx2.astype(jnp.bfloat16), wp_ref[...],
                  preferred_element_type=jnp.float32) + bp_ref[...]
    o_ref[...] = out.astype(o_ref.dtype)


def prepare_mha_params(wq, wk, wv, wp, bp, *, batch, seq_len):
    """One-time parameter preparation — keep out of the per-call path.

    wq/wk/wv: (C, H*hs) with heads packed along the output dim (nn.Linear, stored (in,out)).
    wp: (H*hs, C); bp: (1, C).
    """
    # Pack [Wq * head_size**-0.5 | Wk | Wv] -> (C, 3C); MXU operands in bf16.
    wqkv = jnp.concatenate([wq * (HEAD_SIZE ** -0.5), wk, wv], axis=1).astype(jnp.bfloat16)
    wp_b = wp.astype(jnp.bfloat16)
    bp_f = bp.astype(jnp.float32)

    # Block-diagonal causal mask over the folded (B*T) row axis as an additive bias:
    # 0 where (same batch block AND key <= query), -1e30 elsewhere.
    bt = batch * seq_len
    r = jnp.arange(bt)
    same_batch = (r[:, None] // seq_len) == (r[None, :] // seq_len)
    causal = r[None, :] <= r[:, None]
    bias = jnp.where(same_batch & causal, 0.0, -1e30).astype(jnp.float32)
    return wqkv, wp_b, bp_f, bias


def multi_head_attention(x, params):
    """x: (B, T, C) float32; params from prepare_mha_params."""
    wqkv, wp_b, bp_f, bias = params
    B, T, C = x.shape
    BT = B * T

    kernel = functools.partial(_mha_kernel, num_heads=NUM_HEADS, head_size=HEAD_SIZE)
    out2d = pl.pallas_call(
        kernel,
        out_shape=jax.ShapeDtypeStruct((BT, C), jnp.float32),
        # No grid: single kernel invocation, full-array blocks resident in VMEM (~20 KB,
        # far under the scoped-VMEM default on v5e/v6e/v7x).
        in_specs=[
            pl.BlockSpec(memory_space=pltpu.MemorySpace.VMEM),  # x2d  (B*T, C)
            pl.BlockSpec(memory_space=pltpu.MemorySpace.VMEM),  # Wqkv (C, 3C) bf16, scale folded
            pl.BlockSpec(memory_space=pltpu.MemorySpace.VMEM),  # Wp   (C, C)  bf16
            pl.BlockSpec(memory_space=pltpu.MemorySpace.VMEM),  # bp   (1, C)  f32
            pl.BlockSpec(memory_space=pltpu.MemorySpace.VMEM),  # bias (BT, BT) f32
        ],
        out_specs=pl.BlockSpec(memory_space=pltpu.MemorySpace.VMEM),
    )(x.reshape(BT, C), wqkv, wp_b, bp_f, bias)
    return out2d.reshape(B, T, C)


def _reference(x, wq, wk, wv, wp, bp):
    # Pure-JAX f32 reference with identical semantics to the PyTorch module (eval mode).
    B, T, C = x.shape
    q = x @ wq
    k = x @ wk
    v = x @ wv
    q = q.reshape(B, T, NUM_HEADS, HEAD_SIZE).transpose(0, 2, 1, 3)
    k = k.reshape(B, T, NUM_HEADS, HEAD_SIZE).transpose(0, 2, 1, 3)
    v = v.reshape(B, T, NUM_HEADS, HEAD_SIZE).transpose(0, 2, 1, 3)
    scores = jnp.einsum("bhqd,bhkd->bhqk", q, k) * HEAD_SIZE ** -0.5
    mask = jnp.tril(jnp.ones((T, T), bool))
    scores = jnp.where(mask, scores, -1e30)
    p = jax.nn.softmax(scores, axis=-1)
    out = jnp.einsum("bhqk,bhkd->bhqd", p, v).transpose(0, 2, 1, 3).reshape(B, T, C)
    return out @ wp + bp


if __name__ == "__main__":
    key = jax.random.PRNGKey(0)
    kx, kq, kk, kv, kp, kb = jax.random.split(key, 6)

    x = jax.random.normal(kx, (BATCH, SEQ_LEN, EMBED_DIM), dtype=jnp.float32)
    # Deterministic synthetic parameters (nn.Linear shapes, stored as (in, out)).
    scale = EMBED_DIM ** -0.5
    wq = jax.random.normal(kq, (EMBED_DIM, NUM_HEADS * HEAD_SIZE), jnp.float32) * scale
    wk = jax.random.normal(kk, (EMBED_DIM, NUM_HEADS * HEAD_SIZE), jnp.float32) * scale
    wv = jax.random.normal(kv, (EMBED_DIM, NUM_HEADS * HEAD_SIZE), jnp.float32) * scale
    wp = jax.random.normal(kp, (EMBED_DIM, EMBED_DIM), jnp.float32) * scale
    bp = jax.random.normal(kb, (1, EMBED_DIM), jnp.float32) * 0.1

    # Parameter prep done once (scale-fold, QKV pack, bf16 cast, mask bias).
    params = prepare_mha_params(wq, wk, wv, wp, bp, batch=BATCH, seq_len=SEQ_LEN)

    out = multi_head_attention(x, params)
    out = jax.block_until_ready(out)

    ref = _reference(x, wq, wk, wv, wp, bp)
    assert out.shape == (BATCH, SEQ_LEN, EMBED_DIM)
    # Tolerance accounts for bf16 MXU operands (f32 accumulation) vs the f32 reference.
    assert jnp.allclose(out, ref, atol=3e-2, rtol=3e-2), "mismatch vs reference"
    print("KERNEL_OK")
</pallas_src>

<mosaic_0001>
module attributes {stable_mosaic.version = 11 : i64} {
  func.func @_mha_kernel(%arg0: memref<16x32xf32, #tpu.memory_space<vmem>>, %arg1: memref<32x96xbf16, #tpu.memory_space<vmem>>, %arg2: memref<32x32xbf16, #tpu.memory_space<vmem>>, %arg3: memref<1x32xf32, #tpu.memory_space<vmem>>, %arg4: memref<16x16xf32, #tpu.memory_space<vmem>>, %arg5: memref<16x32xf32, #tpu.memory_space<vmem>>) attributes {dimension_semantics = [], scalar_prefetch = 0 : i64, scratch_operands = 0 : i64, tpu.core_type = #tpu.core_type<tc>} {
    %c0 = arith.constant 0 : index
    %c0_0 = arith.constant 0 : index
    %0 = vector.load %arg0[%c0, %c0_0] : memref<16x32xf32, #tpu.memory_space<vmem>>, vector<16x32xf32>
    %1 = arith.truncf %0 : vector<16x32xf32> to vector<16x32xbf16>
    %c0_1 = arith.constant 0 : index
    %c0_2 = arith.constant 0 : index
    %2 = vector.load %arg1[%c0_1, %c0_2] : memref<32x96xbf16, #tpu.memory_space<vmem>>, vector<32x96xbf16>
    %cst = arith.constant dense<0.000000e+00> : vector<16x96xf32>
    %3 = tpu.matmul %1, %2, %cst {dimension_numbers = #tpu.dot_dimension_numbers<[1], [0], [0], [1], [0, 0, 1, 1], [], []>} : vector<16x32xbf16>, vector<32x96xbf16>, vector<16x96xf32> -> vector<16x96xf32>
    %4 = vector.extract_strided_slice %3 {offsets = [0, 0], sizes = [16, 32], strides = [1, 1]} : vector<16x96xf32> to vector<16x32xf32>
    %5 = vector.shape_cast %4 : vector<16x32xf32> to vector<16x4x8xf32>
    %6 = vector.extract_strided_slice %3 {offsets = [0, 32], sizes = [16, 32], strides = [1, 1]} : vector<16x96xf32> to vector<16x32xf32>
    %7 = vector.shape_cast %6 : vector<16x32xf32> to vector<16x4x8xf32>
    %8 = vector.extract_strided_slice %3 {offsets = [0, 64], sizes = [16, 32], strides = [1, 1]} : vector<16x96xf32> to vector<16x32xf32>
    %9 = vector.shape_cast %8 : vector<16x32xf32> to vector<16x4x8xf32>
    %10 = arith.truncf %5 : vector<16x4x8xf32> to vector<16x4x8xbf16>
    %11 = arith.truncf %7 : vector<16x4x8xf32> to vector<16x4x8xbf16>
    "tpu.trace_start"() <{level = 10 : i32, message = "qhd,khd->hqk"}> : () -> ()
    %cst_3 = arith.constant dense<0.000000e+00> : vector<4x16x16xf32>
    %12 = tpu.matmul %10, %11, %cst_3 {dimension_numbers = #tpu.dot_dimension_numbers<[2], [2], [0], [0], [0, 1, 0, 0, 1, 0], [1], [1]>} : vector<16x4x8xbf16>, vector<16x4x8xbf16>, vector<4x16x16xf32> -> vector<4x16x16xf32>
    "tpu.trace_stop"() : () -> ()
    %c0_4 = arith.constant 0 : index
    %c0_5 = arith.constant 0 : index
    %13 = vector.load %arg4[%c0_4, %c0_5] : memref<16x16xf32, #tpu.memory_space<vmem>>, vector<16x16xf32>
    %14 = vector.shape_cast %13 : vector<16x16xf32> to vector<1x16x16xf32>
    %15 = vector.broadcast %14 : vector<1x16x16xf32> to vector<4x16x16xf32>
    %16 = arith.addf %12, %15 : vector<4x16x16xf32>
    %cst_6 = arith.constant dense<0xFF800000> : vector<4x16xf32>
    %17 = vector.multi_reduction <maximumf>, %16, %cst_6 [2] : vector<4x16x16xf32> to vector<4x16xf32>
    %18 = vector.shape_cast %17 : vector<4x16xf32> to vector<4x16x1xf32>
    %19 = vector.broadcast %18 : vector<4x16x1xf32> to vector<4x16x16xf32>
    %20 = arith.subf %16, %19 : vector<4x16x16xf32>
    %21 = math.exp %20 : vector<4x16x16xf32>
    %cst_7 = arith.constant dense<0.000000e+00> : vector<4x16xf32>
    %22 = vector.multi_reduction <add>, %21, %cst_7 [2] : vector<4x16x16xf32> to vector<4x16xf32>
    %23 = vector.shape_cast %22 : vector<4x16xf32> to vector<4x16x1xf32>
    %24 = vector.broadcast %23 : vector<4x16x1xf32> to vector<4x16x16xf32>
    %25 = arith.divf %21, %24 : vector<4x16x16xf32>
    %26 = arith.truncf %25 : vector<4x16x16xf32> to vector<4x16x16xbf16>
    %27 = arith.truncf %9 : vector<16x4x8xf32> to vector<16x4x8xbf16>
    "tpu.trace_start"() <{level = 10 : i32, message = "hqk,khd->qhd"}> : () -> ()
    %cst_8 = arith.constant dense<0.000000e+00> : vector<4x8x16xf32>
    %28 = tpu.matmul %27, %26, %cst_8 {dimension_numbers = #tpu.dot_dimension_numbers<[0], [2], [2], [1], [0, 1, 0, 2, 1, 1], [1], [0]>} : vector<16x4x8xbf16>, vector<4x16x16xbf16>, vector<4x8x16xf32> -> vector<4x8x16xf32>
    %29 = tpu.transpose %28, [2, 0, 1] : vector<4x8x16xf32> -> vector<16x4x8xf32>
    "tpu.trace_stop"() : () -> ()
    %30 = vector.shape_cast %29 : vector<16x4x8xf32> to vector<16x32xf32>
    %31 = arith.truncf %30 : vector<16x32xf32> to vector<16x32xbf16>
    %c0_9 = arith.constant 0 : index
    %c0_10 = arith.constant 0 : index
    %32 = vector.load %arg2[%c0_9, %c0_10] : memref<32x32xbf16, #tpu.memory_space<vmem>>, vector<32x32xbf16>
    %cst_11 = arith.constant dense<0.000000e+00> : vector<16x32xf32>
    %33 = tpu.matmul %31, %32, %cst_11 {dimension_numbers = #tpu.dot_dimension_numbers<[1], [0], [0], [1], [0, 0, 1, 1], [], []>} : vector<16x32xbf16>, vector<32x32xbf16>, vector<16x32xf32> -> vector<16x32xf32>
    %c0_12 = arith.constant 0 : index
    %c0_13 = arith.constant 0 : index
    %34 = vector.load %arg3[%c0_12, %c0_13] : memref<1x32xf32, #tpu.memory_space<vmem>>, vector<1x32xf32>
    %35 = vector.broadcast %34 : vector<1x32xf32> to vector<16x32xf32>
    %36 = arith.addf %33, %35 : vector<16x32xf32>
    %c0_14 = arith.constant 0 : index
    %c0_15 = arith.constant 0 : index
    %37 = vector.load %arg5[%c0_14, %c0_15] : memref<16x32xf32, #tpu.memory_space<vmem>>, vector<16x32xf32>
    tpu.vector_store %arg5[%c0_14, %c0_15], %36 {strides = array<i32>} : memref<16x32xf32, #tpu.memory_space<vmem>>, vector<16x32xf32>,
    return
  }
}

</mosaic_0001>

<llo_original>
// kernel: tpu_custom_call.1
$region0: #{tpu_custom_call.1}
  #allocation0 [shape = 'u32[]', space=smem, size = 0x4, offset = 0x4, fixed_abs, tag = 'smem constant byte address 0x4 - core index']
  #allocation1 [shape = 'u32[144,128]{1,0:T(1,128)}', space=vmem, size = 0x12000, scoped, tag = 'internal scratch']
  %s0 = inlined_call_operand.hbm [shape: f32[16,32], index: 0, kind: input, shape index: {}]
  %s1 = inlined_call_operand.hbm [shape: bf16[32,96], index: 1, kind: input, shape index: {}]
  %s2 = inlined_call_operand.hbm [shape: bf16[32,32], index: 2, kind: input, shape index: {}]
  %s3 = inlined_call_operand.vmem [shape: f32[1,32], index: 3, kind: input, shape index: {}]
  %s4 = inlined_call_operand.hbm [shape: f32[16,16], index: 4, kind: input, shape index: {}]
  %s5 = inlined_call_operand.hbm [shape: f32[16,32], index: 5, kind: output, shape index: {}]
  %s6 = sld [smem:[#allocation0]]
  $region46: #{tpu_custom_call.1} parent=0
    _
  %s8 = ssub.s32 1, %s6
  %s9 = scalar_select 0, %s8, %s6
  $region1: #{tpu_custom_call.1} parent=0
    #allocation2 [shape = 'u8[8192]{0}', space=vmem, size = 0x2000, scoped, tag = 'input window, operand 0, single buffered']
    #allocation3 [shape = 's32[1]{0}', space=sflag, size = 0x4, scoped, tag = 'scoped memory for tpu_custom_call.1']
    #allocation4 [shape = 's32[1]{0}', space=sflag, size = 0x4, scoped, tag = 'scoped memory for tpu_custom_call.1']
    #allocation5 [shape = 'u8[8192]{0}', space=vmem, size = 0x2000, scoped, tag = 'input window, operand 1, single buffered']
    #allocation6 [shape = 's32[1]{0}', space=sflag, size = 0x4, scoped, tag = 'scoped memory for tpu_custom_call.1']
    #allocation7 [shape = 'u8[8192]{0}', space=vmem, size = 0x2000, scoped, tag = 'input window, operand 2, single buffered']
    #allocation8 [shape = 'u8[8192]{0}', space=vmem, size = 0x2000, scoped, tag = 'input window, operand 4, single buffered']
    #allocation9 [shape = 's32[1]{0}', space=sflag, size = 0x4, scoped, tag = 'scoped memory for tpu_custom_call.1']
    #allocation10 [shape = 'u8[8192]{0}', space=vmem, size = 0x2000, scoped, tag = 'output window, operand 0, single buffered']
    %10 = vsyncpa [#allocation3], 0
    %11 = vsyncpa [#allocation6], 0
    %12 = vsyncpa [#allocation9], 0
    %13 = vsyncpa [#allocation4], 0
    // Predicated region
    $region2: #{tpu_custom_call.1} parent=1 // pred_check
      _
    $region3: #{tpu_custom_call.1} parent=1 // pred_check_branch
      %15 = sbr.rel (0) target = $region5
    $region4: #{tpu_custom_call.1} parent=1 // pred_region
      %s17 = ssub.s32 256, 256
      %18 = vsyncadd [#allocation3], %s17
      %s19 = sshll.u32 [#allocation2], 4
      %s20 = int_to_ptr.vmem [resolvable:$true] %s19
      %25 = dma.hbm_to_vmem [thread:$0]  %s0, 256, %s20, [#allocation3], 128, 128, 8
    $region5: #{tpu_custom_call.1} parent=1 // pred_fallthru
      _
    // Predicated region
    $region6: #{tpu_custom_call.1} parent=1 // pred_check
      _
    $region7: #{tpu_custom_call.1} parent=1 // pred_check_branch
      %27 = sbr.rel (0) target = $region9
    $region8: #{tpu_custom_call.1} parent=1 // pred_region
      %s29 = ssub.s32 256, 256
      %30 = vsyncadd [#allocation6], %s29
      %s31 = sshll.u32 [#allocation5], 4
      %s32 = int_to_ptr.vmem [resolvable:$true] %s31
      %37 = dma.hbm_to_vmem [thread:$0]  %s1, 256, %s32, [#allocation6], 64, 64, 4
    $region9: #{tpu_custom_call.1} parent=1 // pred_fallthru
      _
    // Predicated region
    $region10: #{tpu_custom_call.1} parent=1 // pred_check
      _
    $region11: #{tpu_custom_call.1} parent=1 // pred_check_branch
      %39 = sbr.rel (0) target = $region13
    $region12: #{tpu_custom_call.1} parent=1 // pred_region
      %s41 = ssub.s32 256, 256
      %42 = vsyncadd [#allocation6], %s41
      %s43 = sshll.u32 [#allocation7], 4
      %s44 = int_to_ptr.vmem [resolvable:$true] %s43
      %49 = dma.hbm_to_vmem [thread:$0]  %s2, 256, %s44, [#allocation6], 64, 64, 4
    $region13: #{tpu_custom_call.1} parent=1 // pred_fallthru
      _
    // Predicated region
    $region14: #{tpu_custom_call.1} parent=1 // pred_check
      _
    $region15: #{tpu_custom_call.1} parent=1 // pred_check_branch
      %51 = sbr.rel (0) target = $region17
    $region16: #{tpu_custom_call.1} parent=1 // pred_region
      _
    $region17: #{tpu_custom_call.1} parent=1 // pred_fallthru
      _
    // Predicated region
    $region18: #{tpu_custom_call.1} parent=1 // pred_check
      _
    $region19: #{tpu_custom_call.1} parent=1 // pred_check_branch
      %53 = sbr.rel (0) target = $region21
    $region20: #{tpu_custom_call.1} parent=1 // pred_region
      %s55 = ssub.s32 256, 256
      %56 = vsyncadd [#allocation9], %s55
      %s57 = sshll.u32 [#allocation8], 4
      %s58 = int_to_ptr.vmem [resolvable:$true] %s57
      %63 = dma.hbm_to_vmem [thread:$0]  %s4, 256, %s58, [#allocation9], 128, 128, 8
    $region21: #{tpu_custom_call.1} parent=1 // pred_fallthru
      _
    // Predicated region
    $region22: #{tpu_custom_call.1} parent=1 // pred_check
      _
    $region23: #{tpu_custom_call.1} parent=1 // pred_check_branch
      %65 = sbr.rel (0) target = $region25
    $region24: #{tpu_custom_call.1} parent=1 // pred_region
      %66 = dma.done [#allocation3], 256
    $region25: #{tpu_custom_call.1} parent=1 // pred_fallthru
      _
    // Predicated region
    $region26: #{tpu_custom_call.1} parent=1 // pred_check
      _
    $region27: #{tpu_custom_call.1} parent=1 // pred_check_branch
      %68 = sbr.rel (0) target = $region29
    $region28: #{tpu_custom_call.1} parent=1 // pred_region
      %69 = dma.done [#allocation6], 256
    $region29: #{tpu_custom_call.1} parent=1 // pred_fallthru
      _
    // Predicated region
    $region30: #{tpu_custom_call.1} parent=1 // pred_check
      _
    $region31: #{tpu_custom_call.1} parent=1 // pred_check_branch
      %71 = sbr.rel (0) target = $region33
    $region32: #{tpu_custom_call.1} parent=1 // pred_region
      %72 = dma.done [#allocation6], 256
    $region33: #{tpu_custom_call.1} parent=1 // pred_fallthru
      _
    // Predicated region
    $region34: #{tpu_custom_call.1} parent=1 // pred_check
      _
    $region35: #{tpu_custom_call.1} parent=1 // pred_check_branch
      %74 = sbr.rel (0) target = $region37
    $region36: #{tpu_custom_call.1} parent=1 // pred_region
      %75 = dma.done [#allocation9], 256
    $region37: #{tpu_custom_call.1} parent=1 // pred_fallthru
      _
    %v77 = vld [vmem:[#allocation2] sm:$0xff]
    %v78 = vld [vmem:[#allocation2 + $0x8] sm:$0xff]
    %v79 = vpack.c.bf16 %v78, %v77
    %v80 = vld [vmem:[#allocation5] sm:$0xf]
    %v81 = vld [vmem:[#allocation5 + $0x4] sm:$0xf]
    %v82 = vld [vmem:[#allocation5 + $0x8] sm:$0xf]
    %v83 = vld [vmem:[#allocation5 + $0xc] sm:$0xf]
    %v88 = vunpack.c.l.b16 %v80
    %v89 = vunpack.c.l.b16 %v81
    %v90 = vunpack.c.l.b16 %v82
    %v91 = vunpack.c.l.b16 %v83
    %v92 = vpack.c.b16 %v89, %v88
    %v93 = vpack.c.b16 %v91, %v90
    %vm96 = vcmask 261120
    %v98 = vsel %vm96, %v79, 0
    %100 = vmatprep.subr.bf16.mxu0 0
    %101 = vmatpush1.bf16.msra.mxu0 %v92
    %102 = vmatprep.subr.bf16.mxu0 0
    %103 = vmatpush1.bf16.msra.mxu0 %v93
    %104 = vmatprep.subr.bf16.mxu0 0
    %105 = vmatpush1.bf16.msra.mxu0 0
    %106 = vmatprep.subr.bf16.mxu0 0
    %107 = vmatpush1.bf16.msra.mxu0 0
    %108 = vmatprep.subr.bf16.mxu0 0
    %109 = vmatpush1.bf16.msra.mxu0 0
    %110 = vmatprep.subr.bf16.mxu0 0
    %111 = vmatpush1.bf16.msra.mxu0 0
    %112 = vmatprep.subr.bf16.mxu0 0
    %113 = vmatpush1.bf16.msra.mxu0 0
    %114 = vmatprep.subr.bf16.mxu0 0
    %115 = vmatpush1.bf16.msra.mxu0 0
    %116 = vmatprep.subr.bf16.mxu0 0
    %117 = vmatpush1.bf16.msra.mxu0 0
    %118 = vmatprep.subr.bf16.mxu0 0
    %119 = vmatpush1.bf16.msra.mxu0 0
    %120 = vmatprep.subr.bf16.mxu0 0
    %121 = vmatpush1.bf16.msra.mxu0 0
    %122 = vmatprep.subr.bf16.mxu0 0
    %123 = vmatpush1.bf16.msra.mxu0 0
    %124 = vmatprep.subr.bf16.mxu0 0
    %125 = vmatpush1.bf16.msra.mxu0 0
    %126 = vmatprep.subr.bf16.mxu0 0
    %127 = vmatpush1.bf16.msra.mxu0 0
    %128 = vmatprep.subr.bf16.mxu0 0
    %129 = vmatpush1.bf16.msra.mxu0 0
    %130 = vmatprep.subr.bf16.mxu0 0
    %131 = vmatpush1.bf16.msra.mxu0 0
    %132 = vmatprep.mubr.bf16.mxu0 0
    %133 = vmatmul.mubr.bf16.gmra.mrb[0].mxu0 %v98
    %v134 = vpop.f32.mrb[0].mxu0
    %v135 = vadd.f32 0.0, %v134
    %v136 = vpop.f32.mrb[0].mxu0
    %v137 = vpop.f32.mrb[0].mxu0
    %v138 = vadd.f32 0.0, %v137
    %v139 = vpop.f32.mrb[0].mxu0
    %140 = vdwg.mxu0
    %143 = vrot.lane.b32.xlu0 %v135, 120
    %v144 = vpop.permute.xlu0 %143
    %145 = vrot.lane.b32.xlu0 %v138, 120
    %v146 = vpop.permute.xlu0 %145
    %149 = vrot.lane.b32.xlu0 %v135, 112
    %v150 = vpop.permute.xlu0 %149
    %151 = vrot.lane.b32.xlu0 %v138, 112
    %v152 = vpop.permute.xlu0 %151
    %155 = vrot.lane.b32.xlu0 %v135, 104
    %v156 = vpop.permute.xlu0 %155
    %157 = vrot.lane.b32.xlu0 %v138, 104
    %v158 = vpop.permute.xlu0 %157
    %v161 = vcombine.low %v135, %v150
    %v162 = vcombine.high %v135, %v150
    %v164 = vunpack.c.l.s4 1983009808
    %v165 = vunpack.c.0.s8 %v164
    %v166 = vlaneseq
    %v167 = vshrl.u32 %v166, 7
    %v168 = vsub.s32 %v165, %v167
    %v169 = vrot.slane %v161, %v168
    %v171 = vunpack.c.l.s4 1983009808
    %v172 = vunpack.c.0.s8 %v171
    %v173 = vlaneseq
    %v174 = vshrl.u32 %v173, 7
    %v175 = vsub.s32 %v172, %v174
    %v176 = vrot.slane %v162, %v175
    %v177 = vcombine.low %v144, %v156
    %v178 = vcombine.high %v144, %v156
    %v180 = vunpack.c.l.s4 1983009808
    %v181 = vunpack.c.0.s8 %v180
    %v182 = vlaneseq
    %v183 = vshrl.u32 %v182, 7
    %v184 = vsub.s32 %v181, %v183
    %v185 = vrot.slane %v177, %v184
    %v187 = vunpack.c.l.s4 1983009808
    %v188 = vunpack.c.0.s8 %v187
    %v189 = vlaneseq
    %v190 = vshrl.u32 %v189, 7
    %v191 = vsub.s32 %v188, %v190
    %v192 = vrot.slane %v178, %v191
    %v193 = vcombine.low %v169, %v185
    %v194 = vcombine.high %v169, %v185
    %v196 = vunpack.c.l.s4 1934713408
    %v197 = vunpack.c.0.s8 %v196
    %v198 = vlaneseq
    %v199 = vshrl.u32 %v198, 7
    %v200 = vsub.s32 %v197, %v199
    %v201 = vrot.slane %v193, %v200
    %v203 = vunpack.c.l.s4 1934713408
    %v204 = vunpack.c.0.s8 %v203
    %v205 = vlaneseq
    %v206 = vshrl.u32 %v205, 7
    %v207 = vsub.s32 %v204, %v206
    %v208 = vrot.slane %v194, %v207
    %v209 = vcombine.low %v176, %v192
    %v210 = vcombine.high %v176, %v192
    %v212 = vunpack.c.l.s4 1934713408
    %v213 = vunpack.c.0.s8 %v212
    %v214 = vlaneseq
    %v215 = vshrl.u32 %v214, 7
    %v216 = vsub.s32 %v213, %v215
    %v217 = vrot.slane %v209, %v216
    %v219 = vunpack.c.l.s4 1934713408
    %v220 = vunpack.c.0.s8 %v219
    %v221 = vlaneseq
    %v222 = vshrl.u32 %v221, 7
    %v223 = vsub.s32 %v220, %v222
    %v224 = vrot.slane %v210, %v223
    %v225 = vcombine.high %v201, 0.0
    %v226 = vcombine.high %v208, 0.0
    %v227 = vcombine.high %v217, 0.0
    %v228 = vcombine.high %v224, 0.0
    %v229 = vcombine.low %v138, %v152
    %v230 = vcombine.high %v138, %v152
    %v232 = vunpack.c.l.s4 1983009808
    %v233 = vunpack.c.0.s8 %v232
    %v234 = vlaneseq
    %v235 = vshrl.u32 %v234, 7
    %v236 = vsub.s32 %v233, %v235
    %v237 = vrot.slane %v229, %v236
    %v239 = vunpack.c.l.s4 1983009808
    %v240 = vunpack.c.0.s8 %v239
    %v241 = vlaneseq
    %v242 = vshrl.u32 %v241, 7
    %v243 = vsub.s32 %v240, %v242
    %v244 = vrot.slane %v230, %v243
    %v245 = vcombine.low %v146, %v158
    %v246 = vcombine.high %v146, %v158
    %v248 = vunpack.c.l.s4 1983009808
    %v249 = vunpack.c.0.s8 %v248
    %v250 = vlaneseq
    %v251 = vshrl.u32 %v250, 7
    %v252 = vsub.s32 %v249, %v251
    %v253 = vrot.slane %v245, %v252
    %v255 = vunpack.c.l.s4 1983009808
    %v256 = vunpack.c.0.s8 %v255
    %v257 = vlaneseq
    %v258 = vshrl.u32 %v257, 7
    %v259 = vsub.s32 %v256, %v258
    %v260 = vrot.slane %v246, %v259
    %v261 = vcombine.low %v237, %v253
    %v262 = vcombine.high %v237, %v253
    %v264 = vunpack.c.l.s4 1934713408
    %v265 = vunpack.c.0.s8 %v264
    %v266 = vlaneseq
    %v267 = vshrl.u32 %v266, 7
    %v268 = vsub.s32 %v265, %v267
    %v269 = vrot.slane %v261, %v268
    %v271 = vunpack.c.l.s4 1934713408
    %v272 = vunpack.c.0.s8 %v271
    %v273 = vlaneseq
    %v274 = vshrl.u32 %v273, 7
    %v275 = vsub.s32 %v272, %v274
    %v276 = vrot.slane %v262, %v275
    %v277 = vcombine.low %v244, %v260
    %v278 = vcombine.high %v244, %v260
    %v280 = vunpack.c.l.s4 1934713408
    %v281 = vunpack.c.0.s8 %v280
    %v282 = vlaneseq
    %v283 = vshrl.u32 %v282, 7
    %v284 = vsub.s32 %v281, %v283
    %v285 = vrot.slane %v277, %v284
    %v287 = vunpack.c.l.s4 1934713408
    %v288 = vunpack.c.0.s8 %v287
    %v289 = vlaneseq
    %v290 = vshrl.u32 %v289, 7
    %v291 = vsub.s32 %v288, %v290
    %v292 = vrot.slane %v278, %v291
    %v293 = vcombine.high %v269, 0.0
    %v294 = vcombine.high %v276, 0.0
    %v295 = vcombine.high %v285, 0.0
    %v296 = vcombine.high %v292, 0.0
    %297 = vrot.lane.b32.xlu0 %v135, 96
    %v298 = vpop.permute.xlu0 %297
    %299 = vrot.lane.b32.xlu0 %v138, 96
    %v300 = vpop.permute.xlu0 %299
    %301 = vrot.lane.b32.xlu0 %v144, 96
    %v302 = vpop.permute.xlu0 %301
    %303 = vrot.lane.b32.xlu0 %v146, 96
    %v304 = vpop.permute.xlu0 %303
    %305 = vrot.lane.b32.xlu0 %v150, 96
    %v306 = vpop.permute.xlu0 %305
    %307 = vrot.lane.b32.xlu0 %v152, 96
    %v308 = vpop.permute.xlu0 %307
    %309 = vrot.lane.b32.xlu0 %v156, 96
    %v310 = vpop.permute.xlu0 %309
    %311 = vrot.lane.b32.xlu0 %v158, 96
    %v312 = vpop.permute.xlu0 %311
    %v321 = vcombine.low %v298, %v306
    %v322 = vcombine.high %v298, %v306
    %v324 = vunpack.c.l.s4 1983009808
    %v325 = vunpack.c.0.s8 %v324
    %v326 = vlaneseq
    %v327 = vshrl.u32 %v326, 7
    %v328 = vsub.s32 %v325, %v327
    %v329 = vrot.slane %v321, %v328
    %v331 = vunpack.c.l.s4 1983009808
    %v332 = vunpack.c.0.s8 %v331
    %v333 = vlaneseq
    %v334 = vshrl.u32 %v333, 7
    %v335 = vsub.s32 %v332, %v334
    %v336 = vrot.slane %v322, %v335
    %v337 = vcombine.low %v302, %v310
    %v338 = vcombine.high %v302, %v310
    %v340 = vunpack.c.l.s4 1983009808
    %v341 = vunpack.c.0.s8 %v340
    %v342 = vlaneseq
    %v343 = vshrl.u32 %v342, 7
    %v344 = vsub.s32 %v341, %v343
    %v345 = vrot.slane %v337, %v344
    %v347 = vunpack.c.l.s4 1983009808
    %v348 = vunpack.c.0.s8 %v347
    %v349 = vlaneseq
    %v350 = vshrl.u32 %v349, 7
    %v351 = vsub.s32 %v348, %v350
    %v352 = vrot.slane %v338, %v351
    %v353 = vcombine.low %v329, %v345
    %v354 = vcombine.high %v329, %v345
    %v356 = vunpack.c.l.s4 1934713408
    %v357 = vunpack.c.0.s8 %v356
    %v358 = vlaneseq
    %v359 = vshrl.u32 %v358, 7
    %v360 = vsub.s32 %v357, %v359
    %v361 = vrot.slane %v353, %v360
    %v363 = vunpack.c.l.s4 1934713408
    %v364 = vunpack.c.0.s8 %v363
    %v365 = vlaneseq
    %v366 = vshrl.u32 %v365, 7
    %v367 = vsub.s32 %v364, %v366
    %v368 = vrot.slane %v354, %v367
    %v369 = vcombine.low %v336, %v352
    %v370 = vcombine.high %v336, %v352
    %v372 = vunpack.c.l.s4 1934713408
    %v373 = vunpack.c.0.s8 %v372
    %v374 = vlaneseq
    %v375 = vshrl.u32 %v374, 7
    %v376 = vsub.s32 %v373, %v375
    %v377 = vrot.slane %v369, %v376
    %v379 = vunpack.c.l.s4 1934713408
    %v380 = vunpack.c.0.s8 %v379
    %v381 = vlaneseq
    %v382 = vshrl.u32 %v381, 7
    %v383 = vsub.s32 %v380, %v382
    %v384 = vrot.slane %v370, %v383
    %v385 = vcombine.high %v361, 0.0
    %v386 = vcombine.high %v368, 0.0
    %v387 = vcombine.high %v377, 0.0
    %v388 = vcombine.high %v384, 0.0
    %v389 = vcombine.low %v300, %v308
    %v390 = vcombine.high %v300, %v308
    %v392 = vunpack.c.l.s4 1983009808
    %v393 = vunpack.c.0.s8 %v392
    %v394 = vlaneseq
    %v395 = vshrl.u32 %v394, 7
    %v396 = vsub.s32 %v393, %v395
    %v397 = vrot.slane %v389, %v396
    %v399 = vunpack.c.l.s4 1983009808
    %v400 = vunpack.c.0.s8 %v399
    %v401 = vlaneseq
    %v402 = vshrl.u32 %v401, 7
    %v403 = vsub.s32 %v400, %v402
    %v404 = vrot.slane %v390, %v403
    %v405 = vcombine.low %v304, %v312
    %v406 = vcombine.high %v304, %v312
    %v408 = vunpack.c.l.s4 1983009808
    %v409 = vunpack.c.0.s8 %v408
    %v410 = vlaneseq
    %v411 = vshrl.u32 %v410, 7
    %v412 = vsub.s32 %v409, %v411
    %v413 = vrot.slane %v405, %v412
    %v415 = vunpack.c.l.s4 1983009808
    %v416 = vunpack.c.0.s8 %v415
    %v417 = vlaneseq
    %v418 = vshrl.u32 %v417, 7
    %v419 = vsub.s32 %v416, %v418
    %v420 = vrot.slane %v406, %v419
    %v421 = vcombine.low %v397, %v413
    %v422 = vcombine.high %v397, %v413
    %v424 = vunpack.c.l.s4 1934713408
    %v425 = vunpack.c.0.s8 %v424
    %v426 = vlaneseq
    %v427 = vshrl.u32 %v426, 7
    %v428 = vsub.s32 %v425, %v427
    %v429 = vrot.slane %v421, %v428
    %v431 = vunpack.c.l.s4 1934713408
    %v432 = vunpack.c.0.s8 %v431
    %v433 = vlaneseq
    %v434 = vshrl.u32 %v433, 7
    %v435 = vsub.s32 %v432, %v434
    %v436 = vrot.slane %v422, %v435
    %v437 = vcombine.low %v404, %v420
    %v438 = vcombine.high %v404, %v420
    %v440 = vunpack.c.l.s4 1934713408
    %v441 = vunpack.c.0.s8 %v440
    %v442 = vlaneseq
    %v443 = vshrl.u32 %v442, 7
    %v444 = vsub.s32 %v441, %v443
    %v445 = vrot.slane %v437, %v444
    %v447 = vunpack.c.l.s4 1934713408
    %v448 = vunpack.c.0.s8 %v447
    %v449 = vlaneseq
    %v450 = vshrl.u32 %v449, 7
    %v451 = vsub.s32 %v448, %v450
    %v452 = vrot.slane %v438, %v451
    %v453 = vcombine.high %v429, 0.0
    %v454 = vcombine.high %v436, 0.0
    %v455 = vcombine.high %v445, 0.0
    %v456 = vcombine.high %v452, 0.0
    %457 = vrot.lane.b32.xlu0 %v135, 64
    %v458 = vpop.permute.xlu0 %457
    %459 = vrot.lane.b32.xlu0 %v138, 64
    %v460 = vpop.permute.xlu0 %459
    %461 = vrot.lane.b32.xlu0 %v144, 64
    %v462 = vpop.permute.xlu0 %461
    %463 = vrot.lane.b32.xlu0 %v146, 64
    %v464 = vpop.permute.xlu0 %463
    %465 = vrot.lane.b32.xlu0 %v150, 64
    %v466 = vpop.permute.xlu0 %465
    %467 = vrot.lane.b32.xlu0 %v152, 64
    %v468 = vpop.permute.xlu0 %467
    %469 = vrot.lane.b32.xlu0 %v156, 64
    %v470 = vpop.permute.xlu0 %469
    %471 = vrot.lane.b32.xlu0 %v158, 64
    %v472 = vpop.permute.xlu0 %471
    %v481 = vcombine.low %v458, %v466
    %v482 = vcombine.high %v458, %v466
    %v484 = vunpack.c.l.s4 1983009808
    %v485 = vunpack.c.0.s8 %v484
    %v486 = vlaneseq
    %v487 = vshrl.u32 %v486, 7
    %v488 = vsub.s32 %v485, %v487
    %v489 = vrot.slane %v481, %v488
    %v491 = vunpack.c.l.s4 1983009808
    %v492 = vunpack.c.0.s8 %v491
    %v493 = vlaneseq
    %v494 = vshrl.u32 %v493, 7
    %v495 = vsub.s32 %v492, %v494
    %v496 = vrot.slane %v482, %v495
    %v497 = vcombine.low %v462, %v470
    %v498 = vcombine.high %v462, %v470
    %v500 = vunpack.c.l.s4 1983009808
    %v501 = vunpack.c.0.s8 %v500
    %v502 = vlaneseq
    %v503 = vshrl.u32 %v502, 7
    %v504 = vsub.s32 %v501, %v503
    %v505 = vrot.slane %v497, %v504
    %v507 = vunpack.c.l.s4 1983009808
    %v508 = vunpack.c.0.s8 %v507
    %v509 = vlaneseq
    %v510 = vshrl.u32 %v509, 7
    %v511 = vsub.s32 %v508, %v510
    %v512 = vrot.slane %v498, %v511
    %v513 = vcombine.low %v489, %v505
    %v514 = vcombine.high %v489, %v505
    %v516 = vunpack.c.l.s4 1934713408
    %v517 = vunpack.c.0.s8 %v516
    %v518 = vlaneseq
    %v519 = vshrl.u32 %v518, 7
    %v520 = vsub.s32 %v517, %v519
    %v521 = vrot.slane %v513, %v520
    %v523 = vunpack.c.l.s4 1934713408
    %v524 = vunpack.c.0.s8 %v523
    %v525 = vlaneseq
    %v526 = vshrl.u32 %v525, 7
    %v527 = vsub.s32 %v524, %v526
    %v528 = vrot.slane %v514, %v527
    %v529 = vcombine.low %v496, %v512
    %v530 = vcombine.high %v496, %v512
    %v532 = vunpack.c.l.s4 1934713408
    %v533 = vunpack.c.0.s8 %v532
    %v534 = vlaneseq
    %v535 = vshrl.u32 %v534, 7
    %v536 = vsub.s32 %v533, %v535
    %v537 = vrot.slane %v529, %v536
    %v539 = vunpack.c.l.s4 1934713408
    %v540 = vunpack.c.0.s8 %v539
    %v541 = vlaneseq
    %v542 = vshrl.u32 %v541, 7
    %v543 = vsub.s32 %v540, %v542
    %v544 = vrot.slane %v530, %v543
    %v545 = vcombine.high %v521, 0.0
    %v546 = vcombine.high %v528, 0.0
    %v547 = vcombine.high %v537, 0.0
    %v548 = vcombine.high %v544, 0.0
    %v549 = vcombine.low %v460, %v468
    %v550 = vcombine.high %v460, %v468
    %v552 = vunpack.c.l.s4 1983009808
    %v553 = vunpack.c.0.s8 %v552
    %v554 = vlaneseq
    %v555 = vshrl.u32 %v554, 7
    %v556 = vsub.s32 %v553, %v555
    %v557 = vrot.slane %v549, %v556
    %v559 = vunpack.c.l.s4 1983009808
    %v560 = vunpack.c.0.s8 %v559
    %v561 = vlaneseq
    %v562 = vshrl.u32 %v561, 7
    %v563 = vsub.s32 %v560, %v562
    %v564 = vrot.slane %v550, %v563
    %v565 = vcombine.low %v464, %v472
    %v566 = vcombine.high %v464, %v472
    %v568 = vunpack.c.l.s4 1983009808
    %v569 = vunpack.c.0.s8 %v568
    %v570 = vlaneseq
    %v571 = vshrl.u32 %v570, 7
    %v572 = vsub.s32 %v569, %v571
    %v573 = vrot.slane %v565, %v572
    %v575 = vunpack.c.l.s4 1983009808
    %v576 = vunpack.c.0.s8 %v575
    %v577 = vlaneseq
    %v578 = vshrl.u32 %v577, 7
    %v579 = vsub.s32 %v576, %v578
    %v580 = vrot.slane %v566, %v579
    %v581 = vcombine.low %v557, %v573
    %v582 = vcombine.high %v557, %v573
    %v584 = vunpack.c.l.s4 1934713408
    %v585 = vunpack.c.0.s8 %v584
    %v586 = vlaneseq
    %v587 = vshrl.u32 %v586, 7
    %v588 = vsub.s32 %v585, %v587
    %v589 = vrot.slane %v581, %v588
    %v591 = vunpack.c.l.s4 1934713408
    %v592 = vunpack.c.0.s8 %v591
    %v593 = vlaneseq
    %v594 = vshrl.u32 %v593, 7
    %v595 = vsub.s32 %v592, %v594
    %v596 = vrot.slane %v582, %v595
    %v597 = vcombine.low %v564, %v580
    %v598 = vcombine.high %v564, %v580
    %v600 = vunpack.c.l.s4 1934713408
    %v601 = vunpack.c.0.s8 %v600
    %v602 = vlaneseq
    %v603 = vshrl.u32 %v602, 7
    %v604 = vsub.s32 %v601, %v603
    %v605 = vrot.slane %v597, %v604
    %v607 = vunpack.c.l.s4 1934713408
    %v608 = vunpack.c.0.s8 %v607
    %v609 = vlaneseq
    %v610 = vshrl.u32 %v609, 7
    %v611 = vsub.s32 %v608, %v610
    %v612 = vrot.slane %v598, %v611
    %v613 = vcombine.high %v589, 0.0
    %v614 = vcombine.high %v596, 0.0
    %v615 = vcombine.high %v605, 0.0
    %v616 = vcombine.high %v612, 0.0
    %v617 = vpack.c.bf16 %v201, %v201
    %v618 = vpack.c.bf16 %v225, %v225
    %v619 = vpack.c.bf16 %v208, %v208
    %v620 = vpack.c.bf16 %v226, %v226
    %v621 = vpack.c.bf16 %v217, %v217
    %v622 = vpack.c.bf16 %v227, %v227
    %v623 = vpack.c.bf16 %v224, %v224
    %v624 = vpack.c.bf16 %v228, %v228
    %v625 = vpack.c.bf16 %v269, %v269
    %v626 = vpack.c.bf16 %v293, %v293
    %v627 = vpack.c.bf16 %v276, %v276
    %v628 = vpack.c.bf16 %v294, %v294
    %v629 = vpack.c.bf16 %v285, %v285
    %v630 = vpack.c.bf16 %v295, %v295
    %v631 = vpack.c.bf16 %v292, %v292
    %v632 = vpack.c.bf16 %v296, %v296
    %v633 = vpack.c.bf16 %v361, %v361
    %v634 = vpack.c.bf16 %v385, %v385
    %v635 = vpack.c.bf16 %v368, %v368
    %v636 = vpack.c.bf16 %v386, %v386
    %v637 = vpack.c.bf16 %v377, %v377
    %v638 = vpack.c.bf16 %v387, %v387
    %v639 = vpack.c.bf16 %v384, %v384
    %v640 = vpack.c.bf16 %v388, %v388
    %v641 = vpack.c.bf16 %v429, %v429
    %v642 = vpack.c.bf16 %v453, %v453
    %v643 = vpack.c.bf16 %v436, %v436
    %v644 = vpack.c.bf16 %v454, %v454
    %v645 = vpack.c.bf16 %v445, %v445
    %v646 = vpack.c.bf16 %v455, %v455
    %v647 = vpack.c.bf16 %v452, %v452
    %v648 = vpack.c.bf16 %v456, %v456
    %v649 = vld [vmem:[#allocation8] sm:$0xff]
    %v650 = vld [vmem:[#allocation8 + $0x8] sm:$0xff]
    %v651 = vcombine.low %v617, %v621
    %v653 = vunpack.c.l.s4 1983009808
    %v654 = vunpack.c.0.s8 %v653
    %v655 = vlaneseq
    %v656 = vshrl.u32 %v655, 7
    %v657 = vsub.s32 %v654, %v656
    %v658 = vrot.slane %v651, %v657
    %v659 = vcombine.low %v619, %v623
    %v661 = vunpack.c.l.s4 1983009808
    %v662 = vunpack.c.0.s8 %v661
    %v663 = vlaneseq
    %v664 = vshrl.u32 %v663, 7
    %v665 = vsub.s32 %v662, %v664
    %v666 = vrot.slane %v659, %v665
    %v667 = vcombine.low %v625, %v629
    %v669 = vunpack.c.l.s4 1983009808
    %v670 = vunpack.c.0.s8 %v669
    %v671 = vlaneseq
    %v672 = vshrl.u32 %v671, 7
    %v673 = vsub.s32 %v670, %v672
    %v674 = vrot.slane %v667, %v673
    %v675 = vcombine.low %v627, %v631
    %v677 = vunpack.c.l.s4 1983009808
    %v678 = vunpack.c.0.s8 %v677
    %v679 = vlaneseq
    %v680 = vshrl.u32 %v679, 7
    %v681 = vsub.s32 %v678, %v680
    %v682 = vrot.slane %v675, %v681
    %v683 = vcombine.low %v658, %v666
    %v685 = vunpack.c.l.s4 1934713408
    %v686 = vunpack.c.0.s8 %v685
    %v687 = vlaneseq
    %v688 = vshrl.u32 %v687, 7
    %v689 = vsub.s32 %v686, %v688
    %v690 = vrot.slane %v683, %v689
    %v691 = vcombine.low %v674, %v682
    %v693 = vunpack.c.l.s4 1934713408
    %v694 = vunpack.c.0.s8 %v693
    %v695 = vlaneseq
    %v696 = vshrl.u32 %v695, 7
    %v697 = vsub.s32 %v694, %v696
    %v698 = vrot.slane %v691, %v697
    %v699 = vcombine.low %v690, %v698
    %v700 = vcombine.high %v690, %v698
    %v701 = vcombine.low %v618, %v622
    %v703 = vunpack.c.l.s4 1983009808
    %v704 = vunpack.c.0.s8 %v703
    %v705 = vlaneseq
    %v706 = vshrl.u32 %v705, 7
    %v707 = vsub.s32 %v704, %v706
    %v708 = vrot.slane %v701, %v707
    %v709 = vcombine.low %v620, %v624
    %v711 = vunpack.c.l.s4 1983009808
    %v712 = vunpack.c.0.s8 %v711
    %v713 = vlaneseq
    %v714 = vshrl.u32 %v713, 7
    %v715 = vsub.s32 %v712, %v714
    %v716 = vrot.slane %v709, %v715
    %v717 = vcombine.low %v626, %v630
    %v719 = vunpack.c.l.s4 1983009808
    %v720 = vunpack.c.0.s8 %v719
    %v721 = vlaneseq
    %v722 = vshrl.u32 %v721, 7
    %v723 = vsub.s32 %v720, %v722
    %v724 = vrot.slane %v717, %v723
    %v725 = vcombine.low %v628, %v632
    %v727 = vunpack.c.l.s4 1983009808
    %v728 = vunpack.c.0.s8 %v727
    %v729 = vlaneseq
    %v730 = vshrl.u32 %v729, 7
    %v731 = vsub.s32 %v728, %v730
    %v732 = vrot.slane %v725, %v731
    %v733 = vcombine.low %v708, %v716
    %v735 = vunpack.c.l.s4 1934713408
    %v736 = vunpack.c.0.s8 %v735
    %v737 = vlaneseq
    %v738 = vshrl.u32 %v737, 7
    %v739 = vsub.s32 %v736, %v738
    %v740 = vrot.slane %v733, %v739
    %v741 = vcombine.low %v724, %v732
    %v743 = vunpack.c.l.s4 1934713408
    %v744 = vunpack.c.0.s8 %v743
    %v745 = vlaneseq
    %v746 = vshrl.u32 %v745, 7
    %v747 = vsub.s32 %v744, %v746
    %v748 = vrot.slane %v741, %v747
    %v749 = vcombine.low %v740, %v748
    %v750 = vcombine.high %v740, %v748
    %v753 = vpack.i.b16 %v749, %v699
    %v754 = vshrl.u32 %v699, 16
    %v755 = vshrl.u32 %v749, 16
    %v756 = vpack.i.b16 %v755, %v754
    %v759 = vpack.i.b16 %v750, %v700
    %v760 = vshrl.u32 %v700, 16
    %v761 = vshrl.u32 %v750, 16
    %v762 = vpack.i.b16 %v761, %v760
    %763 = vxpose.xlu0.c.b16.start [1/8] %v633, 128
    %764 = vxpose.xlu0.c.b16.cont [2/8] 0, 128
    %765 = vxpose.xlu0.c.b16.cont [3/8] 0, 128
    %766 = vxpose.xlu0.c.b16.cont [4/8] 0, 128
    %767 = vxpose.xlu0.c.b16.cont [5/8] 0, 128
    %768 = vxpose.xlu0.c.b16.cont [6/8] 0, 128
    %769 = vxpose.xlu0.c.b16.cont [7/8] 0, 128
    %770 = vxpose.xlu0.c.b16.end [8/8] 0, 128
    %v771 = vpop.trf.xlu0
    %v772 = vpop.trf.xlu0
    %v773 = vpop.trf.xlu0
    %v774 = vpop.trf.xlu0
    %v775 = vpop.trf.xlu0
    %v776 = vpop.trf.xlu0
    %v777 = vpop.trf.xlu0
    %v778 = vpop.trf.xlu0
    %779 = vxpose.xlu0.c.b16.start [1/8] %v634, 128
    %780 = vxpose.xlu0.c.b16.cont [2/8] 0, 128
    %781 = vxpose.xlu0.c.b16.cont [3/8] 0, 128
    %782 = vxpose.xlu0.c.b16.cont [4/8] 0, 128
    %783 = vxpose.xlu0.c.b16.cont [5/8] 0, 128
    %784 = vxpose.xlu0.c.b16.cont [6/8] 0, 128
    %785 = vxpose.xlu0.c.b16.cont [7/8] 0, 128
    %786 = vxpose.xlu0.c.b16.end [8/8] 0, 128
    %v787 = vpop.trf.xlu0
    %v788 = vpop.trf.xlu0
    %v789 = vpop.trf.xlu0
    %v790 = vpop.trf.xlu0
    %v791 = vpop.trf.xlu0
    %v792 = vpop.trf.xlu0
    %v793 = vpop.trf.xlu0
    %v794 = vpop.trf.xlu0
    %795 = vxpose.xlu0.c.b16.start [1/8] %v635, 128
    %796 = vxpose.xlu0.c.b16.cont [2/8] 0, 128
    %797 = vxpose.xlu0.c.b16.cont [3/8] 0, 128
    %798 = vxpose.xlu0.c.b16.cont [4/8] 0, 128
    %799 = vxpose.xlu0.c.b16.cont [5/8] 0, 128
    %800 = vxpose.xlu0.c.b16.cont [6/8] 0, 128
    %801 = vxpose.xlu0.c.b16.cont [7/8] 0, 128
    %802 = vxpose.xlu0.c.b16.end [8/8] 0, 128
    %v803 = vpop.trf.xlu0
    %v804 = vpop.trf.xlu0
    %v805 = vpop.trf.xlu0
    %v806 = vpop.trf.xlu0
    %v807 = vpop.trf.xlu0
    %v808 = vpop.trf.xlu0
    %v809 = vpop.trf.xlu0
    %v810 = vpop.trf.xlu0
    %811 = vxpose.xlu0.c.b16.start [1/8] %v636, 128
    %812 = vxpose.xlu0.c.b16.cont [2/8] 0, 128
    %813 = vxpose.xlu0.c.b16.cont [3/8] 0, 128
    %814 = vxpose.xlu0.c.b16.cont [4/8] 0, 128
    %815 = vxpose.xlu0.c.b16.cont [5/8] 0, 128
    %816 = vxpose.xlu0.c.b16.cont [6/8] 0, 128
    %817 = vxpose.xlu0.c.b16.cont [7/8] 0, 128
    %818 = vxpose.xlu0.c.b16.end [8/8] 0, 128
    %v819 = vpop.trf.xlu0
    %v820 = vpop.trf.xlu0
    %v821 = vpop.trf.xlu0
    %v822 = vpop.trf.xlu0
    %v823 = vpop.trf.xlu0
    %v824 = vpop.trf.xlu0
    %v825 = vpop.trf.xlu0
    %v826 = vpop.trf.xlu0
    %827 = vxpose.xlu0.c.b16.start [1/8] %v637, 128
    %828 = vxpose.xlu0.c.b16.cont [2/8] 0, 128
    %829 = vxpose.xlu0.c.b16.cont [3/8] 0, 128
    %830 = vxpose.xlu0.c.b16.cont [4/8] 0, 128
    %831 = vxpose.xlu0.c.b16.cont [5/8] 0, 128
    %832 = vxpose.xlu0.c.b16.cont [6/8] 0, 128
    %833 = vxpose.xlu0.c.b16.cont [7/8] 0, 128
    %834 = vxpose.xlu0.c.b16.end [8/8] 0, 128
    %v835 = vpop.trf.xlu0
    %v836 = vpop.trf.xlu0
    %v837 = vpop.trf.xlu0
    %v838 = vpop.trf.xlu0
    %v839 = vpop.trf.xlu0
    %v840 = vpop.trf.xlu0
    %v841 = vpop.trf.xlu0
    %v842 = vpop.trf.xlu0
    %843 = vxpose.xlu0.c.b16.start [1/8] %v638, 128
    %844 = vxpose.xlu0.c.b16.cont [2/8] 0, 128
    %845 = vxpose.xlu0.c.b16.cont [3/8] 0, 128
    %846 = vxpose.xlu0.c.b16.cont [4/8] 0, 128
    %847 = vxpose.xlu0.c.b16.cont [5/8] 0, 128
    %848 = vxpose.xlu0.c.b16.cont [6/8] 0, 128
    %849 = vxpose.xlu0.c.b16.cont [7/8] 0, 128
    %850 = vxpose.xlu0.c.b16.end [8/8] 0, 128
    %v851 = vpop.trf.xlu0
    %v852 = vpop.trf.xlu0
    %v853 = vpop.trf.xlu0
    %v854 = vpop.trf.xlu0
    %v855 = vpop.trf.xlu0
    %v856 = vpop.trf.xlu0
    %v857 = vpop.trf.xlu0
    %v858 = vpop.trf.xlu0
    %859 = vxpose.xlu0.c.b16.start [1/8] %v639, 128
    %860 = vxpose.xlu0.c.b16.cont [2/8] 0, 128
    %861 = vxpose.xlu0.c.b16.cont [3/8] 0, 128
    %862 = vxpose.xlu0.c.b16.cont [4/8] 0, 128
    %863 = vxpose.xlu0.c.b16.cont [5/8] 0, 128
    %864 = vxpose.xlu0.c.b16.cont [6/8] 0, 128
    %865 = vxpose.xlu0.c.b16.cont [7/8] 0, 128
    %866 = vxpose.xlu0.c.b16.end [8/8] 0, 128
    %v867 = vpop.trf.xlu0
    %v868 = vpop.trf.xlu0
    %v869 = vpop.trf.xlu0
    %v870 = vpop.trf.xlu0
    %v871 = vpop.trf.xlu0
    %v872 = vpop.trf.xlu0
    %v873 = vpop.trf.xlu0
    %v874 = vpop.trf.xlu0
    %875 = vxpose.xlu0.c.b16.start [1/8] %v640, 128
    %876 = vxpose.xlu0.c.b16.cont [2/8] 0, 128
    %877 = vxpose.xlu0.c.b16.cont [3/8] 0, 128
    %878 = vxpose.xlu0.c.b16.cont [4/8] 0, 128
    %879 = vxpose.xlu0.c.b16.cont [5/8] 0, 128
    %880 = vxpose.xlu0.c.b16.cont [6/8] 0, 128
    %881 = vxpose.xlu0.c.b16.cont [7/8] 0, 128
    %882 = vxpose.xlu0.c.b16.end [8/8] 0, 128
    %v883 = vpop.trf.xlu0
    %v884 = vpop.trf.xlu0
    %v885 = vpop.trf.xlu0
    %v886 = vpop.trf.xlu0
    %v887 = vpop.trf.xlu0
    %v888 = vpop.trf.xlu0
    %v889 = vpop.trf.xlu0
    %v890 = vpop.trf.xlu0
    %891 = vxpose.xlu0.c.b16.start [1/8] %v641, 128
    %892 = vxpose.xlu0.c.b16.cont [2/8] 0, 128
    %893 = vxpose.xlu0.c.b16.cont [3/8] 0, 128
    %894 = vxpose.xlu0.c.b16.cont [4/8] 0, 128
    %895 = vxpose.xlu0.c.b16.cont [5/8] 0, 128
    %896 = vxpose.xlu0.c.b16.cont [6/8] 0, 128
    %897 = vxpose.xlu0.c.b16.cont [7/8] 0, 128
    %898 = vxpose.xlu0.c.b16.end [8/8] 0, 128
    %v899 = vpop.trf.xlu0
    %v900 = vpop.trf.xlu0
    %v901 = vpop.trf.xlu0
    %v902 = vpop.trf.xlu0
    %v903 = vpop.trf.xlu0
    %v904 = vpop.trf.xlu0
    %v905 = vpop.trf.xlu0
    %v906 = vpop.trf.xlu0
    %907 = vxpose.xlu0.c.b16.start [1/8] %v642, 128
    %908 = vxpose.xlu0.c.b16.cont [2/8] 0, 128
    %909 = vxpose.xlu0.c.b16.cont [3/8] 0, 128
    %910 = vxpose.xlu0.c.b16.cont [4/8] 0, 128
    %911 = vxpose.xlu0.c.b16.cont [5/8] 0, 128
    %912 = vxpose.xlu0.c.b16.cont [6/8] 0, 128
    %913 = vxpose.xlu0.c.b16.cont [7/8] 0, 128
    %914 = vxpose.xlu0.c.b16.end [8/8] 0, 128
    %v915 = vpop.trf.xlu0
    %v916 = vpop.trf.xlu0
    %v917 = vpop.trf.xlu0
    %v918 = vpop.trf.xlu0
    %v919 = vpop.trf.xlu0
    %v920 = vpop.trf.xlu0
    %v921 = vpop.trf.xlu0
    %v922 = vpop.trf.xlu0
    %923 = vxpose.xlu0.c.b16.start [1/8] %v643, 128
    %924 = vxpose.xlu0.c.b16.cont [2/8] 0, 128
    %925 = vxpose.xlu0.c.b16.cont [3/8] 0, 128
    %926 = vxpose.xlu0.c.b16.cont [4/8] 0, 128
    %927 = vxpose.xlu0.c.b16.cont [5/8] 0, 128
    %928 = vxpose.xlu0.c.b16.cont [6/8] 0, 128
    %929 = vxpose.xlu0.c.b16.cont [7/8] 0, 128
    %930 = vxpose.xlu0.c.b16.end [8/8] 0, 128
    %v931 = vpop.trf.xlu0
    %v932 = vpop.trf.xlu0
    %v933 = vpop.trf.xlu0
    %v934 = vpop.trf.xlu0
    %v935 = vpop.trf.xlu0
    %v936 = vpop.trf.xlu0
    %v937 = vpop.trf.xlu0
    %v938 = vpop.trf.xlu0
    %939 = vxpose.xlu0.c.b16.start [1/8] %v644, 128
    %940 = vxpose.xlu0.c.b16.cont [2/8] 0, 128
    %941 = vxpose.xlu0.c.b16.cont [3/8] 0, 128
    %942 = vxpose.xlu0.c.b16.cont [4/8] 0, 128
    %943 = vxpose.xlu0.c.b16.cont [5/8] 0, 128
    %944 = vxpose.xlu0.c.b16.cont [6/8] 0, 128
    %945 = vxpose.xlu0.c.b16.cont [7/8] 0, 128
    %946 = vxpose.xlu0.c.b16.end [8/8] 0, 128
    %v947 = vpop.trf.xlu0
    %v948 = vpop.trf.xlu0
    %v949 = vpop.trf.xlu0
    %v950 = vpop.trf.xlu0
    %v951 = vpop.trf.xlu0
    %v952 = vpop.trf.xlu0
    %v953 = vpop.trf.xlu0
    %v954 = vpop.trf.xlu0
    %955 = vxpose.xlu0.c.b16.start [1/8] %v645, 128
    %956 = vxpose.xlu0.c.b16.cont [2/8] 0, 128
    %957 = vxpose.xlu0.c.b16.cont [3/8] 0, 128
    %958 = vxpose.xlu0.c.b16.cont [4/8] 0, 128
    %959 = vxpose.xlu0.c.b16.cont [5/8] 0, 128
    %960 = vxpose.xlu0.c.b16.cont [6/8] 0, 128
    %961 = vxpose.xlu0.c.b16.cont [7/8] 0, 128
    %962 = vxpose.xlu0.c.b16.end [8/8] 0, 128
    %v963 = vpop.trf.xlu0
    %v964 = vpop.trf.xlu0
    %v965 = vpop.trf.xlu0
    %v966 = vpop.trf.xlu0
    %v967 = vpop.trf.xlu0
    %v968 = vpop.trf.xlu0
    %v969 = vpop.trf.xlu0
    %v970 = vpop.trf.xlu0
    %971 = vxpose.xlu0.c.b16.start [1/8] %v646, 128
    %972 = vxpose.xlu0.c.b16.cont [2/8] 0, 128
    %973 = vxpose.xlu0.c.b16.cont [3/8] 0, 128
    %974 = vxpose.xlu0.c.b16.cont [4/8] 0, 128
    %975 = vxpose.xlu0.c.b16.cont [5/8] 0, 128
    %976 = vxpose.xlu0.c.b16.cont [6/8] 0, 128
    %977 = vxpose.xlu0.c.b16.cont [7/8] 0, 128
    %978 = vxpose.xlu0.c.b16.end [8/8] 0, 128
    %v979 = vpop.trf.xlu0
    %v980 = vpop.trf.xlu0
    %v981 = vpop.trf.xlu0
    %v982 = vpop.trf.xlu0
    %v983 = vpop.trf.xlu0
    %v984 = vpop.trf.xlu0
    %v985 = vpop.trf.xlu0
    %v986 = vpop.trf.xlu0
    %987 = vxpose.xlu0.c.b16.start [1/8] %v647, 128
    %988 = vxpose.xlu0.c.b16.cont [2/8] 0, 128
    %989 = vxpose.xlu0.c.b16.cont [3/8] 0, 128
    %990 = vxpose.xlu0.c.b16.cont [4/8] 0, 128
    %991 = vxpose.xlu0.c.b16.cont [5/8] 0, 128
    %992 = vxpose.xlu0.c.b16.cont [6/8] 0, 128
    %993 = vxpose.xlu0.c.b16.cont [7/8] 0, 128
    %994 = vxpose.xlu0.c.b16.end [8/8] 0, 128
    %v995 = vpop.trf.xlu0
    %v996 = vpop.trf.xlu0
    %v997 = vpop.trf.xlu0
    %v998 = vpop.trf.xlu0
    %v999 = vpop.trf.xlu0
    %v1000 = vpop.trf.xlu0
    %v1001 = vpop.trf.xlu0
    %v1002 = vpop.trf.xlu0
    %1003 = vxpose.xlu0.c.b16.start [1/8] %v648, 128
    %1004 = vxpose.xlu0.c.b16.cont [2/8] 0, 128
    %1005 = vxpose.xlu0.c.b16.cont [3/8] 0, 128
    %1006 = vxpose.xlu0.c.b16.cont [4/8] 0, 128
    %1007 = vxpose.xlu0.c.b16.cont [5/8] 0, 128
    %1008 = vxpose.xlu0.c.b16.cont [6/8] 0, 128
    %1009 = vxpose.xlu0.c.b16.cont [7/8] 0, 128
    %1010 = vxpose.xlu0.c.b16.end [8/8] 0, 128
    %v1011 = vpop.trf.xlu0
    %v1012 = vpop.trf.xlu0
    %v1013 = vpop.trf.xlu0
    %v1014 = vpop.trf.xlu0
    %v1015 = vpop.trf.xlu0
    %v1016 = vpop.trf.xlu0
    %v1017 = vpop.trf.xlu0
    %v1018 = vpop.trf.xlu0
    %v1019 = vcombine.low %v771, %v835
    %v1021 = vunpack.c.l.s4 1983009808
    %v1022 = vunpack.c.0.s8 %v1021
    %v1023 = vlaneseq
    %v1024 = vshrl.u32 %v1023, 7
    %v1025 = vsub.s32 %v1022, %v1024
    %v1026 = vrot.slane %v1019, %v1025
    %v1027 = vcombine.low %v803, %v867
    %v1029 = vunpack.c.l.s4 1983009808
    %v1030 = vunpack.c.0.s8 %v1029
    %v1031 = vlaneseq
    %v1032 = vshrl.u32 %v1031, 7
    %v1033 = vsub.s32 %v1030, %v1032
    %v1034 = vrot.slane %v1027, %v1033
    %v1035 = vcombine.low %v899, %v963
    %v1037 = vunpack.c.l.s4 1983009808
    %v1038 = vunpack.c.0.s8 %v1037
    %v1039 = vlaneseq
    %v1040 = vshrl.u32 %v1039, 7
    %v1041 = vsub.s32 %v1038, %v1040
    %v1042 = vrot.slane %v1035, %v1041
    %v1043 = vcombine.low %v931, %v995
    %v1045 = vunpack.c.l.s4 1983009808
    %v1046 = vunpack.c.0.s8 %v1045
    %v1047 = vlaneseq
    %v1048 = vshrl.u32 %v1047, 7
    %v1049 = vsub.s32 %v1046, %v1048
    %v1050 = vrot.slane %v1043, %v1049
    %v1051 = vcombine.low %v1026, %v1034
    %v1052 = vcombine.high %v1026, %v1034
    %v1054 = vunpack.c.l.s4 1934713408
    %v1055 = vunpack.c.0.s8 %v1054
    %v1056 = vlaneseq
    %v1057 = vshrl.u32 %v1056, 7
    %v1058 = vsub.s32 %v1055, %v1057
    %v1059 = vrot.slane %v1051, %v1058
    %v1061 = vunpack.c.l.s4 1934713408
    %v1062 = vunpack.c.0.s8 %v1061
    %v1063 = vlaneseq
    %v1064 = vshrl.u32 %v1063, 7
    %v1065 = vsub.s32 %v1062, %v1064
    %v1066 = vrot.slane %v1052, %v1065
    %v1067 = vcombine.low %v1042, %v1050
    %v1068 = vcombine.high %v1042, %v1050
    %v1070 = vunpack.c.l.s4 1934713408
    %v1071 = vunpack.c.0.s8 %v1070
    %v1072 = vlaneseq
    %v1073 = vshrl.u32 %v1072, 7
    %v1074 = vsub.s32 %v1071, %v1073
    %v1075 = vrot.slane %v1067, %v1074
    %v1077 = vunpack.c.l.s4 1934713408
    %v1078 = vunpack.c.0.s8 %v1077
    %v1079 = vlaneseq
    %v1080 = vshrl.u32 %v1079, 7
    %v1081 = vsub.s32 %v1078, %v1080
    %v1082 = vrot.slane %v1068, %v1081
    %v1083 = vcombine.low %v1059, %v1075
    %v1084 = vcombine.high %v1059, %v1075
    %v1085 = vcombine.low %v1066, %v1082
    %v1086 = vcombine.high %v1066, %v1082
    %v1087 = vcombine.low %v787, %v851
    %v1089 = vunpack.c.l.s4 1983009808
    %v1090 = vunpack.c.0.s8 %v1089
    %v1091 = vlaneseq
    %v1092 = vshrl.u32 %v1091, 7
    %v1093 = vsub.s32 %v1090, %v1092
    %v1094 = vrot.slane %v1087, %v1093
    %v1095 = vcombine.low %v819, %v883
    %v1097 = vunpack.c.l.s4 1983009808
    %v1098 = vunpack.c.0.s8 %v1097
    %v1099 = vlaneseq
    %v1100 = vshrl.u32 %v1099, 7
    %v1101 = vsub.s32 %v1098, %v1100
    %v1102 = vrot.slane %v1095, %v1101
    %v1103 = vcombine.low %v915, %v979
    %v1105 = vunpack.c.l.s4 1983009808
    %v1106 = vunpack.c.0.s8 %v1105
    %v1107 = vlaneseq
    %v1108 = vshrl.u32 %v1107, 7
    %v1109 = vsub.s32 %v1106, %v1108
    %v1110 = vrot.slane %v1103, %v1109
    %v1111 = vcombine.low %v947, %v1011
    %v1113 = vunpack.c.l.s4 1983009808
    %v1114 = vunpack.c.0.s8 %v1113
    %v1115 = vlaneseq
    %v1116 = vshrl.u32 %v1115, 7
    %v1117 = vsub.s32 %v1114, %v1116
    %v1118 = vrot.slane %v1111, %v1117
    %v1119 = vcombine.low %v1094, %v1102
    %v1120 = vcombine.high %v1094, %v1102
    %v1122 = vunpack.c.l.s4 1934713408
    %v1123 = vunpack.c.0.s8 %v1122
    %v1124 = vlaneseq
    %v1125 = vshrl.u32 %v1124, 7
    %v1126 = vsub.s32 %v1123, %v1125
    %v1127 = vrot.slane %v1119, %v1126
    %v1129 = vunpack.c.l.s4 1934713408
    %v1130 = vunpack.c.0.s8 %v1129
    %v1131 = vlaneseq
    %v1132 = vshrl.u32 %v1131, 7
    %v1133 = vsub.s32 %v1130, %v1132
    %v1134 = vrot.slane %v1120, %v1133
    %v1135 = vcombine.low %v1110, %v1118
    %v1136 = vcombine.high %v1110, %v1118
    %v1138 = vunpack.c.l.s4 1934713408
    %v1139 = vunpack.c.0.s8 %v1138
    %v1140 = vlaneseq
    %v1141 = vshrl.u32 %v1140, 7
    %v1142 = vsub.s32 %v1139, %v1141
    %v1143 = vrot.slane %v1135, %v1142
    %v1145 = vunpack.c.l.s4 1934713408
    %v1146 = vunpack.c.0.s8 %v1145
    %v1147 = vlaneseq
    %v1148 = vshrl.u32 %v1147, 7
    %v1149 = vsub.s32 %v1146, %v1148
    %v1150 = vrot.slane %v1136, %v1149
    %v1151 = vcombine.low %v1127, %v1143
    %v1152 = vcombine.high %v1127, %v1143
    %v1153 = vcombine.low %v1134, %v1150
    %v1154 = vcombine.high %v1134, %v1150
    %v1157 = vpack.i.b16 %v1151, %v1083
    %v1159 = vshrl.u32 %v1083, 16
    %v1160 = vshrl.u32 %v1151, 16
    %v1161 = vpack.i.b16 %v1160, %v1159
    %v1165 = vpack.i.b16 %v1152, %v1084
    %v1167 = vshrl.u32 %v1084, 16
    %v1168 = vshrl.u32 %v1152, 16
    %v1169 = vpack.i.b16 %v1168, %v1167
    %v1173 = vpack.i.b16 %v1153, %v1085
    %v1175 = vshrl.u32 %v1085, 16
    %v1176 = vshrl.u32 %v1153, 16
    %v1177 = vpack.i.b16 %v1176, %v1175
    %v1181 = vpack.i.b16 %v1154, %v1086
    %v1183 = vshrl.u32 %v1086, 16
    %v1184 = vshrl.u32 %v1154, 16
    %v1185 = vpack.i.b16 %v1184, %v1183
    %1187 = vxpose.xlu0.c.b16.start [1/8] %v1157, 128
    %1188 = vxpose.xlu0.c.b16.cont [2/8] 0, 128
    %1189 = vxpose.xlu0.c.b16.cont [3/8] 0, 128
    %1190 = vxpose.xlu0.c.b16.cont [4/8] 0, 128
    %1191 = vxpose.xlu0.c.b16.cont [5/8] 0, 128
    %1192 = vxpose.xlu0.c.b16.cont [6/8] 0, 128
    %1193 = vxpose.xlu0.c.b16.cont [7/8] 0, 128
    %1194 = vxpose.xlu0.c.b16.end [8/8] 0, 128
    %v1195 = vpop.trf.xlu0
    %v1196 = vpop.trf.xlu0
    %v1197 = vpop.trf.xlu0
    %v1198 = vpop.trf.xlu0
    %v1199 = vpop.trf.xlu0
    %v1200 = vpop.trf.xlu0
    %v1201 = vpop.trf.xlu0
    %v1202 = vpop.trf.xlu0
    %1203 = vxpose.xlu0.c.b16.start [1/8] %v1161, 128
    %1204 = vxpose.xlu0.c.b16.cont [2/8] 0, 128
    %1205 = vxpose.xlu0.c.b16.cont [3/8] 0, 128
    %1206 = vxpose.xlu0.c.b16.cont [4/8] 0, 128
    %1207 = vxpose.xlu0.c.b16.cont [5/8] 0, 128
    %1208 = vxpose.xlu0.c.b16.cont [6/8] 0, 128
    %1209 = vxpose.xlu0.c.b16.cont [7/8] 0, 128
    %1210 = vxpose.xlu0.c.b16.end [8/8] 0, 128
    %v1211 = vpop.trf.xlu0
    %v1212 = vpop.trf.xlu0
    %v1213 = vpop.trf.xlu0
    %v1214 = vpop.trf.xlu0
    %v1215 = vpop.trf.xlu0
    %v1216 = vpop.trf.xlu0
    %v1217 = vpop.trf.xlu0
    %v1218 = vpop.trf.xlu0
    %1219 = vxpose.xlu0.c.b16.start [1/8] %v1165, 128
    %1220 = vxpose.xlu0.c.b16.cont [2/8] 0, 128
    %1221 = vxpose.xlu0.c.b16.cont [3/8] 0, 128
    %1222 = vxpose.xlu0.c.b16.cont [4/8] 0, 128
    %1223 = vxpose.xlu0.c.b16.cont [5/8] 0, 128
    %1224 = vxpose.xlu0.c.b16.cont [6/8] 0, 128
    %1225 = vxpose.xlu0.c.b16.cont [7/8] 0, 128
    %1226 = vxpose.xlu0.c.b16.end [8/8] 0, 128
    %v1227 = vpop.trf.xlu0
    %v1228 = vpop.trf.xlu0
    %v1229 = vpop.trf.xlu0
    %v1230 = vpop.trf.xlu0
    %v1231 = vpop.trf.xlu0
    %v1232 = vpop.trf.xlu0
    %v1233 = vpop.trf.xlu0
    %v1234 = vpop.trf.xlu0
    %1235 = vxpose.xlu0.c.b16.start [1/8] %v1169, 128
    %1236 = vxpose.xlu0.c.b16.cont [2/8] 0, 128
    %1237 = vxpose.xlu0.c.b16.cont [3/8] 0, 128
    %1238 = vxpose.xlu0.c.b16.cont [4/8] 0, 128
    %1239 = vxpose.xlu0.c.b16.cont [5/8] 0, 128
    %1240 = vxpose.xlu0.c.b16.cont [6/8] 0, 128
    %1241 = vxpose.xlu0.c.b16.cont [7/8] 0, 128
    %1242 = vxpose.xlu0.c.b16.end [8/8] 0, 128
    %v1243 = vpop.trf.xlu0
    %v1244 = vpop.trf.xlu0
    %v1245 = vpop.trf.xlu0
    %v1246 = vpop.trf.xlu0
    %v1247 = vpop.trf.xlu0
    %v1248 = vpop.trf.xlu0
    %v1249 = vpop.trf.xlu0
    %v1250 = vpop.trf.xlu0
    %1251 = vxpose.xlu0.c.b16.start [1/8] %v1173, 128
    %1252 = vxpose.xlu0.c.b16.cont [2/8] 0, 128
    %1253 = vxpose.xlu0.c.b16.cont [3/8] 0, 128
    %1254 = vxpose.xlu0.c.b16.cont [4/8] 0, 128
    %1255 = vxpose.xlu0.c.b16.cont [5/8] 0, 128
    %1256 = vxpose.xlu0.c.b16.cont [6/8] 0, 128
    %1257 = vxpose.xlu0.c.b16.cont [7/8] 0, 128
    %1258 = vxpose.xlu0.c.b16.end [8/8] 0, 128
    %v1259 = vpop.trf.xlu0
    %v1260 = vpop.trf.xlu0
    %v1261 = vpop.trf.xlu0
    %v1262 = vpop.trf.xlu0
    %v1263 = vpop.trf.xlu0
    %v1264 = vpop.trf.xlu0
    %v1265 = vpop.trf.xlu0
    %v1266 = vpop.trf.xlu0
    %1267 = vxpose.xlu0.c.b16.start [1/8] %v1177, 128
    %1268 = vxpose.xlu0.c.b16.cont [2/8] 0, 128
    %1269 = vxpose.xlu0.c.b16.cont [3/8] 0, 128
    %1270 = vxpose.xlu0.c.b16.cont [4/8] 0, 128
    %1271 = vxpose.xlu0.c.b16.cont [5/8] 0, 128
    %1272 = vxpose.xlu0.c.b16.cont [6/8] 0, 128
    %1273 = vxpose.xlu0.c.b16.cont [7/8] 0, 128
    %1274 = vxpose.xlu0.c.b16.end [8/8] 0, 128
    %v1275 = vpop.trf.xlu0
    %v1276 = vpop.trf.xlu0
    %v1277 = vpop.trf.xlu0
    %v1278 = vpop.trf.xlu0
    %v1279 = vpop.trf.xlu0
    %v1280 = vpop.trf.xlu0
    %v1281 = vpop.trf.xlu0
    %v1282 = vpop.trf.xlu0
    %1283 = vxpose.xlu0.c.b16.start [1/8] %v1181, 128
    %1284 = vxpose.xlu0.c.b16.cont [2/8] 0, 128
    %1285 = vxpose.xlu0.c.b16.cont [3/8] 0, 128
    %1286 = vxpose.xlu0.c.b16.cont [4/8] 0, 128
    %1287 = vxpose.xlu0.c.b16.cont [5/8] 0, 128
    %1288 = vxpose.xlu0.c.b16.cont [6/8] 0, 128
    %1289 = vxpose.xlu0.c.b16.cont [7/8] 0, 128
    %1290 = vxpose.xlu0.c.b16.end [8/8] 0, 128
    %v1291 = vpop.trf.xlu0
    %v1292 = vpop.trf.xlu0
    %v1293 = vpop.trf.xlu0
    %v1294 = vpop.trf.xlu0
    %v1295 = vpop.trf.xlu0
    %v1296 = vpop.trf.xlu0
    %v1297 = vpop.trf.xlu0
    %v1298 = vpop.trf.xlu0
    %1299 = vxpose.xlu0.c.b16.start [1/8] %v1185, 128
    %1300 = vxpose.xlu0.c.b16.cont [2/8] 0, 128
    %1301 = vxpose.xlu0.c.b16.cont [3/8] 0, 128
    %1302 = vxpose.xlu0.c.b16.cont [4/8] 0, 128
    %1303 = vxpose.xlu0.c.b16.cont [5/8] 0, 128
    %1304 = vxpose.xlu0.c.b16.cont [6/8] 0, 128
    %1305 = vxpose.xlu0.c.b16.cont [7/8] 0, 128
    %1306 = vxpose.xlu0.c.b16.end [8/8] 0, 128
    %v1307 = vpop.trf.xlu0
    %v1308 = vpop.trf.xlu0
    %v1309 = vpop.trf.xlu0
    %v1310 = vpop.trf.xlu0
    %v1311 = vpop.trf.xlu0
    %v1312 = vpop.trf.xlu0
    %v1313 = vpop.trf.xlu0
    %v1314 = vpop.trf.xlu0
    %v1315 = vcombine.low %v1195, %v1259
    %v1317 = vunpack.c.l.s4 1983009808
    %v1318 = vunpack.c.0.s8 %v1317
    %v1319 = vlaneseq
    %v1320 = vshrl.u32 %v1319, 7
    %v1321 = vsub.s32 %v1318, %v1320
    %v1322 = vrot.slane %v1315, %v1321
    %v1323 = vcombine.low %v1227, %v1291
    %v1325 = vunpack.c.l.s4 1983009808
    %v1326 = vunpack.c.0.s8 %v1325
    %v1327 = vlaneseq
    %v1328 = vshrl.u32 %v1327, 7
    %v1329 = vsub.s32 %v1326, %v1328
    %v1330 = vrot.slane %v1323, %v1329
    %v1331 = vcombine.low %v1322, %v1330
    %v1333 = vunpack.c.l.s4 1934713408
    %v1334 = vunpack.c.0.s8 %v1333
    %v1335 = vlaneseq
    %v1336 = vshrl.u32 %v1335, 7
    %v1337 = vsub.s32 %v1334, %v1336
    %v1338 = vrot.slane %v1331, %v1337
    %v1339 = vcombine.high %v1338, 0
    %v1340 = vcombine.low %v1211, %v1275
    %v1342 = vunpack.c.l.s4 1983009808
    %v1343 = vunpack.c.0.s8 %v1342
    %v1344 = vlaneseq
    %v1345 = vshrl.u32 %v1344, 7
    %v1346 = vsub.s32 %v1343, %v1345
    %v1347 = vrot.slane %v1340, %v1346
    %v1348 = vcombine.low %v1243, %v1307
    %v1350 = vunpack.c.l.s4 1983009808
    %v1351 = vunpack.c.0.s8 %v1350
    %v1352 = vlaneseq
    %v1353 = vshrl.u32 %v1352, 7
    %v1354 = vsub.s32 %v1351, %v1353
    %v1355 = vrot.slane %v1348, %v1354
    %v1356 = vcombine.low %v1347, %v1355
    %v1358 = vunpack.c.l.s4 1934713408
    %v1359 = vunpack.c.0.s8 %v1358
    %v1360 = vlaneseq
    %v1361 = vshrl.u32 %v1360, 7
    %v1362 = vsub.s32 %v1359, %v1361
    %v1363 = vrot.slane %v1356, %v1362
    %v1364 = vcombine.high %v1363, 0
    %v1367 = vpack.i.b16 %v1363, %v1338
    %v1368 = vshrl.u32 %v1338, 16
    %v1369 = vshrl.u32 %v1363, 16
    %v1370 = vpack.i.b16 %v1369, %v1368
    %v1373 = vpack.i.b16 %v1364, %v1339
    %v1374 = vshrl.u32 %v1339, 16
    %v1375 = vshrl.u32 %v1364, 16
    %v1376 = vpack.i.b16 %v1375, %v1374
    %vm1377 = vcmask 64512
    %v1379 = vsel %vm1377, %v753, 0
    %vm1381 = vcmask 1043456
    %v1383 = vsel %vm1381, %v1367, 0
    %1385 = vmatprep.subr.bf16.mxu0 0
    %1386 = vmatpush1.bf16.msra.mxu0 %v1383
    %1387 = vmatprep.subr.bf16.mxu0 0
    %1388 = vmatpush1.bf16.msra.mxu0 0
    %1389 = vmatprep.subr.bf16.mxu0 0
    %1390 = vmatpush1.bf16.msra.mxu0 0
    %1391 = vmatprep.subr.bf16.mxu0 0
    %1392 = vmatpush1.bf16.msra.mxu0 0
    %1393 = vmatprep.subr.bf16.mxu0 0
    %1394 = vmatpush1.bf16.msra.mxu0 0
    %1395 = vmatprep.subr.bf16.mxu0 0
    %1396 = vmatpush1.bf16.msra.mxu0 0
    %1397 = vmatprep.subr.bf16.mxu0 0
    %1398 = vmatpush1.bf16.msra.mxu0 0
    %1399 = vmatprep.subr.bf16.mxu0 0
    %1400 = vmatpush1.bf16.msra.mxu0 0
    %1401 = vmatprep.subr.bf16.mxu0 0
    %1402 = vmatpush1.bf16.msra.mxu0 0
    %1403 = vmatprep.subr.bf16.mxu0 0
    %1404 = vmatpush1.bf16.msra.mxu0 0
    %1405 = vmatprep.subr.bf16.mxu0 0
    %1406 = vmatpush1.bf16.msra.mxu0 0
    %1407 = vmatprep.subr.bf16.mxu0 0
    %1408 = vmatpush1.bf16.msra.mxu0 0
    %1409 = vmatprep.subr.bf16.mxu0 0
    %1410 = vmatpush1.bf16.msra.mxu0 0
    %1411 = vmatprep.subr.bf16.mxu0 0
    %1412 = vmatpush1.bf16.msra.mxu0 0
    %1413 = vmatprep.subr.bf16.mxu0 0
    %1414 = vmatpush1.bf16.msra.mxu0 0
    %1415 = vmatprep.subr.bf16.mxu0 0
    %1416 = vmatpush1.bf16.msra.mxu0 0
    %1417 = vmatprep.mubr.bf16.mxu0 0
    %1418 = vmatmul.mubr.bf16.gmra.mrb[0].mxu0 %v1379
    %v1419 = vpop.f32.mrb[0].mxu0
    %v1420 = vadd.f32 %v649, %v1419
    %v1421 = vpop.f32.mrb[0].mxu0
    %v1422 = vpop.f32.mrb[0].mxu0
    %v1423 = vadd.f32 %v650, %v1422
    %v1424 = vpop.f32.mrb[0].mxu0
    %1425 = vdwg.mxu0
    %v1427 = vsel %vm1377, %v756, 0
    %v1430 = vsel %vm1381, %v1370, 0
    %1432 = vmatprep.subr.bf16.mxu0 0
    %1433 = vmatpush1.bf16.msra.mxu0 %v1430
    %1434 = vmatprep.subr.bf16.mxu0 0
    %1435 = vmatpush1.bf16.msra.mxu0 0
    %1436 = vmatprep.subr.bf16.mxu0 0
    %1437 = vmatpush1.bf16.msra.mxu0 0
    %1438 = vmatprep.subr.bf16.mxu0 0
    %1439 = vmatpush1.bf16.msra.mxu0 0
    %1440 = vmatprep.subr.bf16.mxu0 0
    %1441 = vmatpush1.bf16.msra.mxu0 0
    %1442 = vmatprep.subr.bf16.mxu0 0
    %1443 = vmatpush1.bf16.msra.mxu0 0
    %1444 = vmatprep.subr.bf16.mxu0 0
    %1445 = vmatpush1.bf16.msra.mxu0 0
    %1446 = vmatprep.subr.bf16.mxu0 0
    %1447 = vmatpush1.bf16.msra.mxu0 0
    %1448 = vmatprep.subr.bf16.mxu0 0
    %1449 = vmatpush1.bf16.msra.mxu0 0
    %1450 = vmatprep.subr.bf16.mxu0 0
    %1451 = vmatpush1.bf16.msra.mxu0 0
    %1452 = vmatprep.subr.bf16.mxu0 0
    %1453 = vmatpush1.bf16.msra.mxu0 0
    %1454 = vmatprep.subr.bf16.mxu0 0
    %1455 = vmatpush1.bf16.msra.mxu0 0
    %1456 = vmatprep.subr.bf16.mxu0 0
    %1457 = vmatpush1.bf16.msra.mxu0 0
    %1458 = vmatprep.subr.bf16.mxu0 0
    %1459 = vmatpush1.bf16.msra.mxu0 0
    %1460 = vmatprep.subr.bf16.mxu0 0
    %1461 = vmatpush1.bf16.msra.mxu0 0
    %1462 = vmatprep.subr.bf16.mxu0 0
    %1463 = vmatpush1.bf16.msra.mxu0 0
    %1464 = vmatprep.mubr.bf16.mxu0 0
    %1465 = vmatmul.mubr.bf16.gmra.mrb[0].mxu0 %v1427
    %v1466 = vpop.f32.mrb[0].mxu0
    %v1467 = vadd.f32 %v649, %v1466
    %v1468 = vpop.f32.mrb[0].mxu0
    %v1469 = vpop.f32.mrb[0].mxu0
    %v1470 = vadd.f32 %v650, %v1469
    %v1471 = vpop.f32.mrb[0].mxu0
    %1472 = vdwg.mxu0
    %v1474 = vsel %vm1377, %v759, 0
    %v1477 = vsel %vm1381, %v1373, 0
    %1479 = vmatprep.subr.bf16.mxu0 0
    %1480 = vmatpush1.bf16.msra.mxu0 %v1477
    %1481 = vmatprep.subr.bf16.mxu0 0
    %1482 = vmatpush1.bf16.msra.mxu0 0
    %1483 = vmatprep.subr.bf16.mxu0 0
    %1484 = vmatpush1.bf16.msra.mxu0 0
    %1485 = vmatprep.subr.bf16.mxu0 0
    %1486 = vmatpush1.bf16.msra.mxu0 0
    %1487 = vmatprep.subr.bf16.mxu0 0
    %1488 = vmatpush1.bf16.msra.mxu0 0
    %1489 = vmatprep.subr.bf16.mxu0 0
    %1490 = vmatpush1.bf16.msra.mxu0 0
    %1491 = vmatprep.subr.bf16.mxu0 0
    %1492 = vmatpush1.bf16.msra.mxu0 0
    %1493 = vmatprep.subr.bf16.mxu0 0
    %1494 = vmatpush1.bf16.msra.mxu0 0
    %1495 = vmatprep.subr.bf16.mxu0 0
    %1496 = vmatpush1.bf16.msra.mxu0 0
    %1497 = vmatprep.subr.bf16.mxu0 0
    %1498 = vmatpush1.bf16.msra.mxu0 0
    %1499 = vmatprep.subr.bf16.mxu0 0
    %1500 = vmatpush1.bf16.msra.mxu0 0
    %1501 = vmatprep.subr.bf16.mxu0 0
    %1502 = vmatpush1.bf16.msra.mxu0 0
    %1503 = vmatprep.subr.bf16.mxu0 0
    %1504 = vmatpush1.bf16.msra.mxu0 0
    %1505 = vmatprep.subr.bf16.mxu0 0
    %1506 = vmatpush1.bf16.msra.mxu0 0
    %1507 = vmatprep.subr.bf16.mxu0 0
    %1508 = vmatpush1.bf16.msra.mxu0 0
    %1509 = vmatprep.subr.bf16.mxu0 0
    %1510 = vmatpush1.bf16.msra.mxu0 0
    %1511 = vmatprep.mubr.bf16.mxu0 0
    %1512 = vmatmul.mubr.bf16.gmra.mrb[0].mxu0 %v1474
    %v1513 = vpop.f32.mrb[0].mxu0
    %v1514 = vadd.f32 %v649, %v1513
    %v1515 = vpop.f32.mrb[0].mxu0
    %v1516 = vpop.f32.mrb[0].mxu0
    %v1517 = vadd.f32 %v650, %v1516
    %v1518 = vpop.f32.mrb[0].mxu0
    %1519 = vdwg.mxu0
    %v1521 = vsel %vm1377, %v762, 0
    %v1524 = vsel %vm1381, %v1376, 0
    %1526 = vmatprep.subr.bf16.mxu0 0
    %1527 = vmatpush1.bf16.msra.mxu0 %v1524
    %1528 = vmatprep.subr.bf16.mxu0 0
    %1529 = vmatpush1.bf16.msra.mxu0 0
    %1530 = vmatprep.subr.bf16.mxu0 0
    %1531 = vmatpush1.bf16.msra.mxu0 0
    %1532 = vmatprep.subr.bf16.mxu0 0
    %1533 = vmatpush1.bf16.msra.mxu0 0
    %1534 = vmatprep.subr.bf16.mxu0 0
    %1535 = vmatpush1.bf16.msra.mxu0 0
    %1536 = vmatprep.subr.bf16.mxu0 0
    %1537 = vmatpush1.bf16.msra.mxu0 0
    %1538 = vmatprep.subr.bf16.mxu0 0
    %1539 = vmatpush1.bf16.msra.mxu0 0
    %1540 = vmatprep.subr.bf16.mxu0 0
    %1541 = vmatpush1.bf16.msra.mxu0 0
    %1542 = vmatprep.subr.bf16.mxu0 0
    %1543 = vmatpush1.bf16.msra.mxu0 0
    %1544 = vmatprep.subr.bf16.mxu0 0
    %1545 = vmatpush1.bf16.msra.mxu0 0
    %1546 = vmatprep.subr.bf16.mxu0 0
    %1547 = vmatpush1.bf16.msra.mxu0 0
    %1548 = vmatprep.subr.bf16.mxu0 0
    %1549 = vmatpush1.bf16.msra.mxu0 0
    %1550 = vmatprep.subr.bf16.mxu0 0
    %1551 = vmatpush1.bf16.msra.mxu0 0
    %1552 = vmatprep.subr.bf16.mxu0 0
    %1553 = vmatpush1.bf16.msra.mxu0 0
    %1554 = vmatprep.subr.bf16.mxu0 0
    %1555 = vmatpush1.bf16.msra.mxu0 0
    %1556 = vmatprep.subr.bf16.mxu0 0
    %1557 = vmatpush1.bf16.msra.mxu0 0
    %1558 = vmatprep.mubr.bf16.mxu0 0
    %1559 = vmatmul.mubr.bf16.gmra.mrb[0].mxu0 %v1521
    %v1560 = vpop.f32.mrb[0].mxu0
    %v1561 = vadd.f32 %v649, %v1560
    %v1562 = vpop.f32.mrb[0].mxu0
    %v1563 = vpop.f32.mrb[0].mxu0
    %v1564 = vadd.f32 %v650, %v1563
    %v1565 = vpop.f32.mrb[0].mxu0
    %1566 = vdwg.mxu0
    %vm1567 = vcmask 130048
    %v1568 = vsel %vm1567, %v1420, -inf
    %1569 = vmax.xlane.f32.xlu0 %v1568
    %v1570 = vpop.xlane.xlu0 %1569
    %v1571 = vsel %vm1567, %v1423, -inf
    %1572 = vmax.xlane.f32.xlu0 %v1571
    %v1573 = vpop.xlane.xlu0 %1572
    %v1574 = vsel %vm1567, %v1467, -inf
    %1575 = vmax.xlane.f32.xlu0 %v1574
    %v1576 = vpop.xlane.xlu0 %1575
    %v1577 = vsel %vm1567, %v1470, -inf
    %1578 = vmax.xlane.f32.xlu0 %v1577
    %v1579 = vpop.xlane.xlu0 %1578
    %v1580 = vsel %vm1567, %v1514, -inf
    %1581 = vmax.xlane.f32.xlu0 %v1580
    %v1582 = vpop.xlane.xlu0 %1581
    %v1583 = vsel %vm1567, %v1517, -inf
    %1584 = vmax.xlane.f32.xlu0 %v1583
    %v1585 = vpop.xlane.xlu0 %1584
    %v1586 = vsel %vm1567, %v1561, -inf
    %1587 = vmax.xlane.f32.xlu0 %v1586
    %v1588 = vpop.xlane.xlu0 %1587
    %v1589 = vsel %vm1567, %v1564, -inf
    %1590 = vmax.xlane.f32.xlu0 %v1589
    %v1591 = vpop.xlane.xlu0 %1590
    %v1592 = vsub.f32 %v1420, %v1570
    %v1593 = vsub.f32 %v1423, %v1573
    %v1594 = vsub.f32 %v1467, %v1576
    %v1595 = vsub.f32 %v1470, %v1579
    %v1596 = vsub.f32 %v1514, %v1582
    %v1597 = vsub.f32 %v1517, %v1585
    %v1598 = vsub.f32 %v1561, %v1588
    %v1599 = vsub.f32 %v1564, %v1591
    %v1600 = vmul.f32 %v1592, 1.442695
    %v1601 = vpow.pop %v1600
    %v1602 = vmul.f32 %v1593, 1.442695
    %v1603 = vpow.pop %v1602
    %v1604 = vmul.f32 %v1594, 1.442695
    %v1605 = vpow.pop %v1604
    %v1606 = vmul.f32 %v1595, 1.442695
    %v1607 = vpow.pop %v1606
    %v1608 = vmul.f32 %v1596, 1.442695
    %v1609 = vpow.pop %v1608
    %v1610 = vmul.f32 %v1597, 1.442695
    %v1611 = vpow.pop %v1610
    %v1612 = vmul.f32 %v1598, 1.442695
    %v1613 = vpow.pop %v1612
    %v1614 = vmul.f32 %v1599, 1.442695
    %v1615 = vpow.pop %v1614
    %v1616 = vsel %vm1567, %v1601, 0.0
    %1617 = vadd.xlane.f32.xlu0 %v1616
    %v1618 = vpop.xlane.xlu0 %1617
    %v1619 = vsel %vm1567, %v1603, 0.0
    %1620 = vadd.xlane.f32.xlu0 %v1619
    %v1621 = vpop.xlane.xlu0 %1620
    %v1622 = vsel %vm1567, %v1605, 0.0
    %1623 = vadd.xlane.f32.xlu0 %v1622
    %v1624 = vpop.xlane.xlu0 %1623
    %v1625 = vsel %vm1567, %v1607, 0.0
    %1626 = vadd.xlane.f32.xlu0 %v1625
    %v1627 = vpop.xlane.xlu0 %1626
    %v1628 = vsel %vm1567, %v1609, 0.0
    %1629 = vadd.xlane.f32.xlu0 %v1628
    %v1630 = vpop.xlane.xlu0 %1629
    %v1631 = vsel %vm1567, %v1611, 0.0
    %1632 = vadd.xlane.f32.xlu0 %v1631
    %v1633 = vpop.xlane.xlu0 %1632
    %v1634 = vsel %vm1567, %v1613, 0.0
    %1635 = vadd.xlane.f32.xlu0 %v1634
    %v1636 = vpop.xlane.xlu0 %1635
    %v1637 = vsel %vm1567, %v1615, 0.0
    %1638 = vadd.xlane.f32.xlu0 %v1637
    %v1639 = vpop.xlane.xlu0 %1638
    %v1640 = vrcp.pop %v1618
    %v1641 = vmul.f32 %v1601, %v1640
    %v1642 = vrcp.pop %v1621
    %v1643 = vmul.f32 %v1603, %v1642
    %v1644 = vrcp.pop %v1624
    %v1645 = vmul.f32 %v1605, %v1644
    %v1646 = vrcp.pop %v1627
    %v1647 = vmul.f32 %v1607, %v1646
    %v1648 = vrcp.pop %v1630
    %v1649 = vmul.f32 %v1609, %v1648
    %v1650 = vrcp.pop %v1633
    %v1651 = vmul.f32 %v1611, %v1650
    %v1652 = vrcp.pop %v1636
    %v1653 = vmul.f32 %v1613, %v1652
    %v1654 = vrcp.pop %v1639
    %v1655 = vmul.f32 %v1615, %v1654
    %v1656 = vpack.c.bf16 %v1643, %v1641
    %v1657 = vpack.c.bf16 %v1647, %v1645
    %v1658 = vpack.c.bf16 %v1651, %v1649
    %v1659 = vpack.c.bf16 %v1655, %v1653
    %v1660 = vpack.c.bf16 %v521, %v521
    %v1661 = vpack.c.bf16 %v545, %v545
    %v1662 = vpack.c.bf16 %v528, %v528
    %v1663 = vpack.c.bf16 %v546, %v546
    %v1664 = vpack.c.bf16 %v537, %v537
    %v1665 = vpack.c.bf16 %v547, %v547
    %v1666 = vpack.c.bf16 %v544, %v544
    %v1667 = vpack.c.bf16 %v548, %v548
    %v1668 = vpack.c.bf16 %v589, %v589
    %v1669 = vpack.c.bf16 %v613, %v613
    %v1670 = vpack.c.bf16 %v596, %v596
    %v1671 = vpack.c.bf16 %v614, %v614
    %v1672 = vpack.c.bf16 %v605, %v605
    %v1673 = vpack.c.bf16 %v615, %v615
    %v1674 = vpack.c.bf16 %v612, %v612
    %v1675 = vpack.c.bf16 %v616, %v616
    %1676 = vxpose.xlu0.c.b16.start [1/8] %v1660, 128
    %1677 = vxpose.xlu0.c.b16.cont [2/8] 0, 128
    %1678 = vxpose.xlu0.c.b16.cont [3/8] 0, 128
    %1679 = vxpose.xlu0.c.b16.cont [4/8] 0, 128
    %1680 = vxpose.xlu0.c.b16.cont [5/8] 0, 128
    %1681 = vxpose.xlu0.c.b16.cont [6/8] 0, 128
    %1682 = vxpose.xlu0.c.b16.cont [7/8] 0, 128
    %1683 = vxpose.xlu0.c.b16.end [8/8] 0, 128
    %v1684 = vpop.trf.xlu0
    %v1685 = vpop.trf.xlu0
    %v1686 = vpop.trf.xlu0
    %v1687 = vpop.trf.xlu0
    %v1688 = vpop.trf.xlu0
    %v1689 = vpop.trf.xlu0
    %v1690 = vpop.trf.xlu0
    %v1691 = vpop.trf.xlu0
    %1692 = vxpose.xlu0.c.b16.start [1/8] %v1661, 128
    %1693 = vxpose.xlu0.c.b16.cont [2/8] 0, 128
    %1694 = vxpose.xlu0.c.b16.cont [3/8] 0, 128
    %1695 = vxpose.xlu0.c.b16.cont [4/8] 0, 128
    %1696 = vxpose.xlu0.c.b16.cont [5/8] 0, 128
    %1697 = vxpose.xlu0.c.b16.cont [6/8] 0, 128
    %1698 = vxpose.xlu0.c.b16.cont [7/8] 0, 128
    %1699 = vxpose.xlu0.c.b16.end [8/8] 0, 128
    %v1700 = vpop.trf.xlu0
    %v1701 = vpop.trf.xlu0
    %v1702 = vpop.trf.xlu0
    %v1703 = vpop.trf.xlu0
    %v1704 = vpop.trf.xlu0
    %v1705 = vpop.trf.xlu0
    %v1706 = vpop.trf.xlu0
    %v1707 = vpop.trf.xlu0
    %1708 = vxpose.xlu0.c.b16.start [1/8] %v1662, 128
    %1709 = vxpose.xlu0.c.b16.cont [2/8] 0, 128
    %1710 = vxpose.xlu0.c.b16.cont [3/8] 0, 128
    %1711 = vxpose.xlu0.c.b16.cont [4/8] 0, 128
    %1712 = vxpose.xlu0.c.b16.cont [5/8] 0, 128
    %1713 = vxpose.xlu0.c.b16.cont [6/8] 0, 128
    %1714 = vxpose.xlu0.c.b16.cont [7/8] 0, 128
    %1715 = vxpose.xlu0.c.b16.end [8/8] 0, 128
    %v1716 = vpop.trf.xlu0
    %v1717 = vpop.trf.xlu0
    %v1718 = vpop.trf.xlu0
    %v1719 = vpop.trf.xlu0
    %v1720 = vpop.trf.xlu0
    %v1721 = vpop.trf.xlu0
    %v1722 = vpop.trf.xlu0
    %v1723 = vpop.trf.xlu0
    %1724 = vxpose.xlu0.c.b16.start [1/8] %v1663, 128
    %1725 = vxpose.xlu0.c.b16.cont [2/8] 0, 128
    %1726 = vxpose.xlu0.c.b16.cont [3/8] 0, 128
    %1727 = vxpose.xlu0.c.b16.cont [4/8] 0, 128
    %1728 = vxpose.xlu0.c.b16.cont [5/8] 0, 128
    %1729 = vxpose.xlu0.c.b16.cont [6/8] 0, 128
    %1730 = vxpose.xlu0.c.b16.cont [7/8] 0, 128
    %1731 = vxpose.xlu0.c.b16.end [8/8] 0, 128
    %v1732 = vpop.trf.xlu0
    %v1733 = vpop.trf.xlu0
    %v1734 = vpop.trf.xlu0
    %v1735 = vpop.trf.xlu0
    %v1736 = vpop.trf.xlu0
    %v1737 = vpop.trf.xlu0
    %v1738 = vpop.trf.xlu0
    %v1739 = vpop.trf.xlu0
    %1740 = vxpose.xlu0.c.b16.start [1/8] %v1664, 128
    %1741 = vxpose.xlu0.c.b16.cont [2/8] 0, 128
    %1742 = vxpose.xlu0.c.b16.cont [3/8] 0, 128
    %1743 = vxpose.xlu0.c.b16.cont [4/8] 0, 128
    %1744 = vxpose.xlu0.c.b16.cont [5/8] 0, 128
    %1745 = vxpose.xlu0.c.b16.cont [6/8] 0, 128
    %1746 = vxpose.xlu0.c.b16.cont [7/8] 0, 128
    %1747 = vxpose.xlu0.c.b16.end [8/8] 0, 128
    %v1748 = vpop.trf.xlu0
    %v1749 = vpop.trf.xlu0
    %v1750 = vpop.trf.xlu0
    %v1751 = vpop.trf.xlu0
    %v1752 = vpop.trf.xlu0
    %v1753 = vpop.trf.xlu0
    %v1754 = vpop.trf.xlu0
    %v1755 = vpop.trf.xlu0
    %1756 = vxpose.xlu0.c.b16.start [1/8] %v1665, 128
    %1757 = vxpose.xlu0.c.b16.cont [2/8] 0, 128
    %1758 = vxpose.xlu0.c.b16.cont [3/8] 0, 128
    %1759 = vxpose.xlu0.c.b16.cont [4/8] 0, 128
    %1760 = vxpose.xlu0.c.b16.cont [5/8] 0, 128
    %1761 = vxpose.xlu0.c.b16.cont [6/8] 0, 128
    %1762 = vxpose.xlu0.c.b16.cont [7/8] 0, 128
    %1763 = vxpose.xlu0.c.b16.end [8/8] 0, 128
    %v1764 = vpop.trf.xlu0
    %v1765 = vpop.trf.xlu0
    %v1766 = vpop.trf.xlu0
    %v1767 = vpop.trf.xlu0
    %v1768 = vpop.trf.xlu0
    %v1769 = vpop.trf.xlu0
    %v1770 = vpop.trf.xlu0
    %v1771 = vpop.trf.xlu0
    %1772 = vxpose.xlu0.c.b16.start [1/8] %v1666, 128
    %1773 = vxpose.xlu0.c.b16.cont [2/8] 0, 128
    %1774 = vxpose.xlu0.c.b16.cont [3/8] 0, 128
    %1775 = vxpose.xlu0.c.b16.cont [4/8] 0, 128
    %1776 = vxpose.xlu0.c.b16.cont [5/8] 0, 128
    %1777 = vxpose.xlu0.c.b16.cont [6/8] 0, 128
    %1778 = vxpose.xlu0.c.b16.cont [7/8] 0, 128
    %1779 = vxpose.xlu0.c.b16.end [8/8] 0, 128
    %v1780 = vpop.trf.xlu0
    %v1781 = vpop.trf.xlu0
    %v1782 = vpop.trf.xlu0
    %v1783 = vpop.trf.xlu0
    %v1784 = vpop.trf.xlu0
    %v1785 = vpop.trf.xlu0
    %v1786 = vpop.trf.xlu0
    %v1787 = vpop.trf.xlu0
    %1788 = vxpose.xlu0.c.b16.start [1/8] %v1667, 128
    %1789 = vxpose.xlu0.c.b16.cont [2/8] 0, 128
    %1790 = vxpose.xlu0.c.b16.cont [3/8] 0, 128
    %1791 = vxpose.xlu0.c.b16.cont [4/8] 0, 128
    %1792 = vxpose.xlu0.c.b16.cont [5/8] 0, 128
    %1793 = vxpose.xlu0.c.b16.cont [6/8] 0, 128
    %1794 = vxpose.xlu0.c.b16.cont [7/8] 0, 128
    %1795 = vxpose.xlu0.c.b16.end [8/8] 0, 128
    %v1796 = vpop.trf.xlu0
    %v1797 = vpop.trf.xlu0
    %v1798 = vpop.trf.xlu0
    %v1799 = vpop.trf.xlu0
    %v1800 = vpop.trf.xlu0
    %v1801 = vpop.trf.xlu0
    %v1802 = vpop.trf.xlu0
    %v1803 = vpop.trf.xlu0
    %1804 = vxpose.xlu0.c.b16.start [1/8] %v1668, 128
    %1805 = vxpose.xlu0.c.b16.cont [2/8] 0, 128
    %1806 = vxpose.xlu0.c.b16.cont [3/8] 0, 128
    %1807 = vxpose.xlu0.c.b16.cont [4/8] 0, 128
    %1808 = vxpose.xlu0.c.b16.cont [5/8] 0, 128
    %1809 = vxpose.xlu0.c.b16.cont [6/8] 0, 128
    %1810 = vxpose.xlu0.c.b16.cont [7/8] 0, 128
    %1811 = vxpose.xlu0.c.b16.end [8/8] 0, 128
    %v1812 = vpop.trf.xlu0
    %v1813 = vpop.trf.xlu0
    %v1814 = vpop.trf.xlu0
    %v1815 = vpop.trf.xlu0
    %v1816 = vpop.trf.xlu0
    %v1817 = vpop.trf.xlu0
    %v1818 = vpop.trf.xlu0
    %v1819 = vpop.trf.xlu0
    %1820 = vxpose.xlu0.c.b16.start [1/8] %v1669, 128
    %1821 = vxpose.xlu0.c.b16.cont [2/8] 0, 128
    %1822 = vxpose.xlu0.c.b16.cont [3/8] 0, 128
    %1823 = vxpose.xlu0.c.b16.cont [4/8] 0, 128
    %1824 = vxpose.xlu0.c.b16.cont [5/8] 0, 128
    %1825 = vxpose.xlu0.c.b16.cont [6/8] 0, 128
    %1826 = vxpose.xlu0.c.b16.cont [7/8] 0, 128
    %1827 = vxpose.xlu0.c.b16.end [8/8] 0, 128
    %v1828 = vpop.trf.xlu0
    %v1829 = vpop.trf.xlu0
    %v1830 = vpop.trf.xlu0
    %v1831 = vpop.trf.xlu0
    %v1832 = vpop.trf.xlu0
    %v1833 = vpop.trf.xlu0
    %v1834 = vpop.trf.xlu0
    %v1835 = vpop.trf.xlu0
    %1836 = vxpose.xlu0.c.b16.start [1/8] %v1670, 128
    %1837 = vxpose.xlu0.c.b16.cont [2/8] 0, 128
    %1838 = vxpose.xlu0.c.b16.cont [3/8] 0, 128
    %1839 = vxpose.xlu0.c.b16.cont [4/8] 0, 128
    %1840 = vxpose.xlu0.c.b16.cont [5/8] 0, 128
    %1841 = vxpose.xlu0.c.b16.cont [6/8] 0, 128
    %1842 = vxpose.xlu0.c.b16.cont [7/8] 0, 128
    %1843 = vxpose.xlu0.c.b16.end [8/8] 0, 128
    %v1844 = vpop.trf.xlu0
    %v1845 = vpop.trf.xlu0
    %v1846 = vpop.trf.xlu0
    %v1847 = vpop.trf.xlu0
    %v1848 = vpop.trf.xlu0
    %v1849 = vpop.trf.xlu0
    %v1850 = vpop.trf.xlu0
    %v1851 = vpop.trf.xlu0
    %1852 = vxpose.xlu0.c.b16.start [1/8] %v1671, 128
    %1853 = vxpose.xlu0.c.b16.cont [2/8] 0, 128
    %1854 = vxpose.xlu0.c.b16.cont [3/8] 0, 128
    %1855 = vxpose.xlu0.c.b16.cont [4/8] 0, 128
    %1856 = vxpose.xlu0.c.b16.cont [5/8] 0, 128
    %1857 = vxpose.xlu0.c.b16.cont [6/8] 0, 128
    %1858 = vxpose.xlu0.c.b16.cont [7/8] 0, 128
    %1859 = vxpose.xlu0.c.b16.end [8/8] 0, 128
    %v1860 = vpop.trf.xlu0
    %v1861 = vpop.trf.xlu0
    %v1862 = vpop.trf.xlu0
    %v1863 = vpop.trf.xlu0
    %v1864 = vpop.trf.xlu0
    %v1865 = vpop.trf.xlu0
    %v1866 = vpop.trf.xlu0
    %v1867 = vpop.trf.xlu0
    %1868 = vxpose.xlu0.c.b16.start [1/8] %v1672, 128
    %1869 = vxpose.xlu0.c.b16.cont [2/8] 0, 128
    %1870 = vxpose.xlu0.c.b16.cont [3/8] 0, 128
    %1871 = vxpose.xlu0.c.b16.cont [4/8] 0, 128
    %1872 = vxpose.xlu0.c.b16.cont [5/8] 0, 128
    %1873 = vxpose.xlu0.c.b16.cont [6/8] 0, 128
    %1874 = vxpose.xlu0.c.b16.cont [7/8] 0, 128
    %1875 = vxpose.xlu0.c.b16.end [8/8] 0, 128
    %v1876 = vpop.trf.xlu0
    %v1877 = vpop.trf.xlu0
    %v1878 = vpop.trf.xlu0
    %v1879 = vpop.trf.xlu0
    %v1880 = vpop.trf.xlu0
    %v1881 = vpop.trf.xlu0
    %v1882 = vpop.trf.xlu0
    %v1883 = vpop.trf.xlu0
    %1884 = vxpose.xlu0.c.b16.start [1/8] %v1673, 128
    %1885 = vxpose.xlu0.c.b16.cont [2/8] 0, 128
    %1886 = vxpose.xlu0.c.b16.cont [3/8] 0, 128
    %1887 = vxpose.xlu0.c.b16.cont [4/8] 0, 128
    %1888 = vxpose.xlu0.c.b16.cont [5/8] 0, 128
    %1889 = vxpose.xlu0.c.b16.cont [6/8] 0, 128
    %1890 = vxpose.xlu0.c.b16.cont [7/8] 0, 128
    %1891 = vxpose.xlu0.c.b16.end [8/8] 0, 128
    %v1892 = vpop.trf.xlu0
    %v1893 = vpop.trf.xlu0
    %v1894 = vpop.trf.xlu0
    %v1895 = vpop.trf.xlu0
    %v1896 = vpop.trf.xlu0
    %v1897 = vpop.trf.xlu0
    %v1898 = vpop.trf.xlu0
    %v1899 = vpop.trf.xlu0
    %1900 = vxpose.xlu0.c.b16.start [1/8] %v1674, 128
    %1901 = vxpose.xlu0.c.b16.cont [2/8] 0, 128
    %1902 = vxpose.xlu0.c.b16.cont [3/8] 0, 128
    %1903 = vxpose.xlu0.c.b16.cont [4/8] 0, 128
    %1904 = vxpose.xlu0.c.b16.cont [5/8] 0, 128
    %1905 = vxpose.xlu0.c.b16.cont [6/8] 0, 128
    %1906 = vxpose.xlu0.c.b16.cont [7/8] 0, 128
    %1907 = vxpose.xlu0.c.b16.end [8/8] 0, 128
    %v1908 = vpop.trf.xlu0
    %v1909 = vpop.trf.xlu0
    %v1910 = vpop.trf.xlu0
    %v1911 = vpop.trf.xlu0
    %v1912 = vpop.trf.xlu0
    %v1913 = vpop.trf.xlu0
    %v1914 = vpop.trf.xlu0
    %v1915 = vpop.trf.xlu0
    %1916 = vxpose.xlu0.c.b16.start [1/8] %v1675, 128
    %1917 = vxpose.xlu0.c.b16.cont [2/8] 0, 128
    %1918 = vxpose.xlu0.c.b16.cont [3/8] 0, 128
    %1919 = vxpose.xlu0.c.b16.cont [4/8] 0, 128
    %1920 = vxpose.xlu0.c.b16.cont [5/8] 0, 128
    %1921 = vxpose.xlu0.c.b16.cont [6/8] 0, 128
    %1922 = vxpose.xlu0.c.b16.cont [7/8] 0, 128
    %1923 = vxpose.xlu0.c.b16.end [8/8] 0, 128
    %v1924 = vpop.trf.xlu0
    %v1925 = vpop.trf.xlu0
    %v1926 = vpop.trf.xlu0
    %v1927 = vpop.trf.xlu0
    %v1928 = vpop.trf.xlu0
    %v1929 = vpop.trf.xlu0
    %v1930 = vpop.trf.xlu0
    %v1931 = vpop.trf.xlu0
    %v1932 = vcombine.low %v1684, %v1748
    %v1934 = vunpack.c.l.s4 1983009808
    %v1935 = vunpack.c.0.s8 %v1934
    %v1936 = vlaneseq
    %v1937 = vshrl.u32 %v1936, 7
    %v1938 = vsub.s32 %v1935, %v1937
    %v1939 = vrot.slane %v1932, %v1938
    %v1940 = vcombine.low %v1716, %v1780
    %v1942 = vunpack.c.l.s4 1983009808
    %v1943 = vunpack.c.0.s8 %v1942
    %v1944 = vlaneseq
    %v1945 = vshrl.u32 %v1944, 7
    %v1946 = vsub.s32 %v1943, %v1945
    %v1947 = vrot.slane %v1940, %v1946
    %v1948 = vcombine.low %v1812, %v1876
    %v1950 = vunpack.c.l.s4 1983009808
    %v1951 = vunpack.c.0.s8 %v1950
    %v1952 = vlaneseq
    %v1953 = vshrl.u32 %v1952, 7
    %v1954 = vsub.s32 %v1951, %v1953
    %v1955 = vrot.slane %v1948, %v1954
    %v1956 = vcombine.low %v1844, %v1908
    %v1958 = vunpack.c.l.s4 1983009808
    %v1959 = vunpack.c.0.s8 %v1958
    %v1960 = vlaneseq
    %v1961 = vshrl.u32 %v1960, 7
    %v1962 = vsub.s32 %v1959, %v1961
    %v1963 = vrot.slane %v1956, %v1962
    %v1964 = vcombine.low %v1939, %v1947
    %v1965 = vcombine.high %v1939, %v1947
    %v1967 = vunpack.c.l.s4 1934713408
    %v1968 = vunpack.c.0.s8 %v1967
    %v1969 = vlaneseq
    %v1970 = vshrl.u32 %v1969, 7
    %v1971 = vsub.s32 %v1968, %v1970
    %v1972 = vrot.slane %v1964, %v1971
    %v1974 = vunpack.c.l.s4 1934713408
    %v1975 = vunpack.c.0.s8 %v1974
    %v1976 = vlaneseq
    %v1977 = vshrl.u32 %v1976, 7
    %v1978 = vsub.s32 %v1975, %v1977
    %v1979 = vrot.slane %v1965, %v1978
    %v1980 = vcombine.low %v1955, %v1963
    %v1981 = vcombine.high %v1955, %v1963
    %v1983 = vunpack.c.l.s4 1934713408
    %v1984 = vunpack.c.0.s8 %v1983
    %v1985 = vlaneseq
    %v1986 = vshrl.u32 %v1985, 7
    %v1987 = vsub.s32 %v1984, %v1986
    %v1988 = vrot.slane %v1980, %v1987
    %v1990 = vunpack.c.l.s4 1934713408
    %v1991 = vunpack.c.0.s8 %v1990
    %v1992 = vlaneseq
    %v1993 = vshrl.u32 %v1992, 7
    %v1994 = vsub.s32 %v1991, %v1993
    %v1995 = vrot.slane %v1981, %v1994
    %v1996 = vcombine.low %v1972, %v1988
    %v1997 = vcombine.high %v1972, %v1988
    %v1998 = vcombine.low %v1979, %v1995
    %v1999 = vcombine.high %v1979, %v1995
    %v2000 = vcombine.low %v1700, %v1764
    %v2002 = vunpack.c.l.s4 1983009808
    %v2003 = vunpack.c.0.s8 %v2002
    %v2004 = vlaneseq
    %v2005 = vshrl.u32 %v2004, 7
    %v2006 = vsub.s32 %v2003, %v2005
    %v2007 = vrot.slane %v2000, %v2006
    %v2008 = vcombine.low %v1732, %v1796
    %v2010 = vunpack.c.l.s4 1983009808
    %v2011 = vunpack.c.0.s8 %v2010
    %v2012 = vlaneseq
    %v2013 = vshrl.u32 %v2012, 7
    %v2014 = vsub.s32 %v2011, %v2013
    %v2015 = vrot.slane %v2008, %v2014
    %v2016 = vcombine.low %v1828, %v1892
    %v2018 = vunpack.c.l.s4 1983009808
    %v2019 = vunpack.c.0.s8 %v2018
    %v2020 = vlaneseq
    %v2021 = vshrl.u32 %v2020, 7
    %v2022 = vsub.s32 %v2019, %v2021
    %v2023 = vrot.slane %v2016, %v2022
    %v2024 = vcombine.low %v1860, %v1924
    %v2026 = vunpack.c.l.s4 1983009808
    %v2027 = vunpack.c.0.s8 %v2026
    %v2028 = vlaneseq
    %v2029 = vshrl.u32 %v2028, 7
    %v2030 = vsub.s32 %v2027, %v2029
    %v2031 = vrot.slane %v2024, %v2030
    %v2032 = vcombine.low %v2007, %v2015
    %v2033 = vcombine.high %v2007, %v2015
    %v2035 = vunpack.c.l.s4 1934713408
    %v2036 = vunpack.c.0.s8 %v2035
    %v2037 = vlaneseq
    %v2038 = vshrl.u32 %v2037, 7
    %v2039 = vsub.s32 %v2036, %v2038
    %v2040 = vrot.slane %v2032, %v2039
    %v2042 = vunpack.c.l.s4 1934713408
    %v2043 = vunpack.c.0.s8 %v2042
    %v2044 = vlaneseq
    %v2045 = vshrl.u32 %v2044, 7
    %v2046 = vsub.s32 %v2043, %v2045
    %v2047 = vrot.slane %v2033, %v2046
    %v2048 = vcombine.low %v2023, %v2031
    %v2049 = vcombine.high %v2023, %v2031
    %v2051 = vunpack.c.l.s4 1934713408
    %v2052 = vunpack.c.0.s8 %v2051
    %v2053 = vlaneseq
    %v2054 = vshrl.u32 %v2053, 7
    %v2055 = vsub.s32 %v2052, %v2054
    %v2056 = vrot.slane %v2048, %v2055
    %v2058 = vunpack.c.l.s4 1934713408
    %v2059 = vunpack.c.0.s8 %v2058
    %v2060 = vlaneseq
    %v2061 = vshrl.u32 %v2060, 7
    %v2062 = vsub.s32 %v2059, %v2061
    %v2063 = vrot.slane %v2049, %v2062
    %v2064 = vcombine.low %v2040, %v2056
    %v2065 = vcombine.high %v2040, %v2056
    %v2066 = vcombine.low %v2047, %v2063
    %v2067 = vcombine.high %v2047, %v2063
    %v2070 = vpack.i.b16 %v2064, %v1996
    %v2072 = vshrl.u32 %v1996, 16
    %v2073 = vshrl.u32 %v2064, 16
    %v2074 = vpack.i.b16 %v2073, %v2072
    %v2078 = vpack.i.b16 %v2065, %v1997
    %v2080 = vshrl.u32 %v1997, 16
    %v2081 = vshrl.u32 %v2065, 16
    %v2082 = vpack.i.b16 %v2081, %v2080
    %v2086 = vpack.i.b16 %v2066, %v1998
    %v2088 = vshrl.u32 %v1998, 16
    %v2089 = vshrl.u32 %v2066, 16
    %v2090 = vpack.i.b16 %v2089, %v2088
    %v2094 = vpack.i.b16 %v2067, %v1999
    %v2096 = vshrl.u32 %v1999, 16
    %v2097 = vshrl.u32 %v2067, 16
    %v2098 = vpack.i.b16 %v2097, %v2096
    %2100 = vxpose.xlu0.c.b16.start [1/8] %v2070, 128
    %2101 = vxpose.xlu0.c.b16.cont [2/8] 0, 128
    %2102 = vxpose.xlu0.c.b16.cont [3/8] 0, 128
    %2103 = vxpose.xlu0.c.b16.cont [4/8] 0, 128
    %2104 = vxpose.xlu0.c.b16.cont [5/8] 0, 128
    %2105 = vxpose.xlu0.c.b16.cont [6/8] 0, 128
    %2106 = vxpose.xlu0.c.b16.cont [7/8] 0, 128
    %2107 = vxpose.xlu0.c.b16.end [8/8] 0, 128
    %v2108 = vpop.trf.xlu0
    %v2109 = vpop.trf.xlu0
    %v2110 = vpop.trf.xlu0
    %v2111 = vpop.trf.xlu0
    %v2112 = vpop.trf.xlu0
    %v2113 = vpop.trf.xlu0
    %v2114 = vpop.trf.xlu0
    %v2115 = vpop.trf.xlu0
    %2116 = vxpose.xlu0.c.b16.start [1/8] %v2074, 128
    %2117 = vxpose.xlu0.c.b16.cont [2/8] 0, 128
    %2118 = vxpose.xlu0.c.b16.cont [3/8] 0, 128
    %2119 = vxpose.xlu0.c.b16.cont [4/8] 0, 128
    %2120 = vxpose.xlu0.c.b16.cont [5/8] 0, 128
    %2121 = vxpose.xlu0.c.b16.cont [6/8] 0, 128
    %2122 = vxpose.xlu0.c.b16.cont [7/8] 0, 128
    %2123 = vxpose.xlu0.c.b16.end [8/8] 0, 128
    %v2124 = vpop.trf.xlu0
    %v2125 = vpop.trf.xlu0
    %v2126 = vpop.trf.xlu0
    %v2127 = vpop.trf.xlu0
    %v2128 = vpop.trf.xlu0
    %v2129 = vpop.trf.xlu0
    %v2130 = vpop.trf.xlu0
    %v2131 = vpop.trf.xlu0
    %2132 = vxpose.xlu0.c.b16.start [1/8] %v2078, 128
    %2133 = vxpose.xlu0.c.b16.cont [2/8] 0, 128
    %2134 = vxpose.xlu0.c.b16.cont [3/8] 0, 128
    %2135 = vxpose.xlu0.c.b16.cont [4/8] 0, 128
    %2136 = vxpose.xlu0.c.b16.cont [5/8] 0, 128
    %2137 = vxpose.xlu0.c.b16.cont [6/8] 0, 128
    %2138 = vxpose.xlu0.c.b16.cont [7/8] 0, 128
    %2139 = vxpose.xlu0.c.b16.end [8/8] 0, 128
    %v2140 = vpop.trf.xlu0
    %v2141 = vpop.trf.xlu0
    %v2142 = vpop.trf.xlu0
    %v2143 = vpop.trf.xlu0
    %v2144 = vpop.trf.xlu0
    %v2145 = vpop.trf.xlu0
    %v2146 = vpop.trf.xlu0
    %v2147 = vpop.trf.xlu0
    %2148 = vxpose.xlu0.c.b16.start [1/8] %v2082, 128
    %2149 = vxpose.xlu0.c.b16.cont [2/8] 0, 128
    %2150 = vxpose.xlu0.c.b16.cont [3/8] 0, 128
    %2151 = vxpose.xlu0.c.b16.cont [4/8] 0, 128
    %2152 = vxpose.xlu0.c.b16.cont [5/8] 0, 128
    %2153 = vxpose.xlu0.c.b16.cont [6/8] 0, 128
    %2154 = vxpose.xlu0.c.b16.cont [7/8] 0, 128
    %2155 = vxpose.xlu0.c.b16.end [8/8] 0, 128
    %v2156 = vpop.trf.xlu0
    %v2157 = vpop.trf.xlu0
    %v2158 = vpop.trf.xlu0
    %v2159 = vpop.trf.xlu0
    %v2160 = vpop.trf.xlu0
    %v2161 = vpop.trf.xlu0
    %v2162 = vpop.trf.xlu0
    %v2163 = vpop.trf.xlu0
    %2164 = vxpose.xlu0.c.b16.start [1/8] %v2086, 128
    %2165 = vxpose.xlu0.c.b16.cont [2/8] 0, 128
    %2166 = vxpose.xlu0.c.b16.cont [3/8] 0, 128
    %2167 = vxpose.xlu0.c.b16.cont [4/8] 0, 128
    %2168 = vxpose.xlu0.c.b16.cont [5/8] 0, 128
    %2169 = vxpose.xlu0.c.b16.cont [6/8] 0, 128
    %2170 = vxpose.xlu0.c.b16.cont [7/8] 0, 128
    %2171 = vxpose.xlu0.c.b16.end [8/8] 0, 128
    %v2172 = vpop.trf.xlu0
    %v2173 = vpop.trf.xlu0
    %v2174 = vpop.trf.xlu0
    %v2175 = vpop.trf.xlu0
    %v2176 = vpop.trf.xlu0
    %v2177 = vpop.trf.xlu0
    %v2178 = vpop.trf.xlu0
    %v2179 = vpop.trf.xlu0
    %2180 = vxpose.xlu0.c.b16.start [1/8] %v2090, 128
    %2181 = vxpose.xlu0.c.b16.cont [2/8] 0, 128
    %2182 = vxpose.xlu0.c.b16.cont [3/8] 0, 128
    %2183 = vxpose.xlu0.c.b16.cont [4/8] 0, 128
    %2184 = vxpose.xlu0.c.b16.cont [5/8] 0, 128
    %2185 = vxpose.xlu0.c.b16.cont [6/8] 0, 128
    %2186 = vxpose.xlu0.c.b16.cont [7/8] 0, 128
    %2187 = vxpose.xlu0.c.b16.end [8/8] 0, 128
    %v2188 = vpop.trf.xlu0
    %v2189 = vpop.trf.xlu0
    %v2190 = vpop.trf.xlu0
    %v2191 = vpop.trf.xlu0
    %v2192 = vpop.trf.xlu0
    %v2193 = vpop.trf.xlu0
    %v2194 = vpop.trf.xlu0
    %v2195 = vpop.trf.xlu0
    %2196 = vxpose.xlu0.c.b16.start [1/8] %v2094, 128
    %2197 = vxpose.xlu0.c.b16.cont [2/8] 0, 128
    %2198 = vxpose.xlu0.c.b16.cont [3/8] 0, 128
    %2199 = vxpose.xlu0.c.b16.cont [4/8] 0, 128
    %2200 = vxpose.xlu0.c.b16.cont [5/8] 0, 128
    %2201 = vxpose.xlu0.c.b16.cont [6/8] 0, 128
    %2202 = vxpose.xlu0.c.b16.cont [7/8] 0, 128
    %2203 = vxpose.xlu0.c.b16.end [8/8] 0, 128
    %v2204 = vpop.trf.xlu0
    %v2205 = vpop.trf.xlu0
    %v2206 = vpop.trf.xlu0
    %v2207 = vpop.trf.xlu0
    %v2208 = vpop.trf.xlu0
    %v2209 = vpop.trf.xlu0
    %v2210 = vpop.trf.xlu0
    %v2211 = vpop.trf.xlu0
    %2212 = vxpose.xlu0.c.b16.start [1/8] %v2098, 128
    %2213 = vxpose.xlu0.c.b16.cont [2/8] 0, 128
    %2214 = vxpose.xlu0.c.b16.cont [3/8] 0, 128
    %2215 = vxpose.xlu0.c.b16.cont [4/8] 0, 128
    %2216 = vxpose.xlu0.c.b16.cont [5/8] 0, 128
    %2217 = vxpose.xlu0.c.b16.cont [6/8] 0, 128
    %2218 = vxpose.xlu0.c.b16.cont [7/8] 0, 128
    %2219 = vxpose.xlu0.c.b16.end [8/8] 0, 128
    %v2220 = vpop.trf.xlu0
    %v2221 = vpop.trf.xlu0
    %v2222 = vpop.trf.xlu0
    %v2223 = vpop.trf.xlu0
    %v2224 = vpop.trf.xlu0
    %v2225 = vpop.trf.xlu0
    %v2226 = vpop.trf.xlu0
    %v2227 = vpop.trf.xlu0
    %v2228 = vcombine.low %v2108, %v2172
    %v2230 = vunpack.c.l.s4 1983009808
    %v2231 = vunpack.c.0.s8 %v2230
    %v2232 = vlaneseq
    %v2233 = vshrl.u32 %v2232, 7
    %v2234 = vsub.s32 %v2231, %v2233
    %v2235 = vrot.slane %v2228, %v2234
    %v2236 = vcombine.low %v2140, %v2204
    %v2238 = vunpack.c.l.s4 1983009808
    %v2239 = vunpack.c.0.s8 %v2238
    %v2240 = vlaneseq
    %v2241 = vshrl.u32 %v2240, 7
    %v2242 = vsub.s32 %v2239, %v2241
    %v2243 = vrot.slane %v2236, %v2242
    %v2244 = vcombine.low %v2235, %v2243
    %v2246 = vunpack.c.l.s4 1934713408
    %v2247 = vunpack.c.0.s8 %v2246
    %v2248 = vlaneseq
    %v2249 = vshrl.u32 %v2248, 7
    %v2250 = vsub.s32 %v2247, %v2249
    %v2251 = vrot.slane %v2244, %v2250
    %v2252 = vcombine.high %v2251, 0
    %v2253 = vcombine.low %v2124, %v2188
    %v2255 = vunpack.c.l.s4 1983009808
    %v2256 = vunpack.c.0.s8 %v2255
    %v2257 = vlaneseq
    %v2258 = vshrl.u32 %v2257, 7
    %v2259 = vsub.s32 %v2256, %v2258
    %v2260 = vrot.slane %v2253, %v2259
    %v2261 = vcombine.low %v2156, %v2220
    %v2263 = vunpack.c.l.s4 1983009808
    %v2264 = vunpack.c.0.s8 %v2263
    %v2265 = vlaneseq
    %v2266 = vshrl.u32 %v2265, 7
    %v2267 = vsub.s32 %v2264, %v2266
    %v2268 = vrot.slane %v2261, %v2267
    %v2269 = vcombine.low %v2260, %v2268
    %v2271 = vunpack.c.l.s4 1934713408
    %v2272 = vunpack.c.0.s8 %v2271
    %v2273 = vlaneseq
    %v2274 = vshrl.u32 %v2273, 7
    %v2275 = vsub.s32 %v2272, %v2274
    %v2276 = vrot.slane %v2269, %v2275
    %v2277 = vcombine.high %v2276, 0
    %v2280 = vpack.i.b16 %v2276, %v2251
    %v2281 = vshrl.u32 %v2251, 16
    %v2282 = vshrl.u32 %v2276, 16
    %v2283 = vpack.i.b16 %v2282, %v2281
    %v2286 = vpack.i.b16 %v2277, %v2252
    %v2287 = vshrl.u32 %v2252, 16
    %v2288 = vshrl.u32 %v2277, 16
    %v2289 = vpack.i.b16 %v2288, %v2287
    %v2291 = vsel %vm1567, %v2280, 0
    %v2294 = vsel %vm1567, %v1656, 0
    %2296 = vmatprep.subr.bf16.mxu0 0
    %2297 = vmatpush1.bf16.xpose.msra.mxu0 %v2294
    %2298 = vmatprep.subr.bf16.mxu0 0
    %2299 = vmatpush1.bf16.xpose.msra.mxu0 0
    %2300 = vmatprep.subr.bf16.mxu0 0
    %2301 = vmatpush1.bf16.xpose.msra.mxu0 0
    %2302 = vmatprep.subr.bf16.mxu0 0
    %2303 = vmatpush1.bf16.xpose.msra.mxu0 0
    %2304 = vmatprep.subr.bf16.mxu0 0
    %2305 = vmatpush1.bf16.xpose.msra.mxu0 0
    %2306 = vmatprep.subr.bf16.mxu0 0
    %2307 = vmatpush1.bf16.xpose.msra.mxu0 0
    %2308 = vmatprep.subr.bf16.mxu0 0
    %2309 = vmatpush1.bf16.xpose.msra.mxu0 0
    %2310 = vmatprep.subr.bf16.mxu0 0
    %2311 = vmatpush1.bf16.xpose.msra.mxu0 0
    %2312 = vmatprep.subr.bf16.mxu0 0
    %2313 = vmatpush1.bf16.xpose.msra.mxu0 0
    %2314 = vmatprep.subr.bf16.mxu0 0
    %2315 = vmatpush1.bf16.xpose.msra.mxu0 0
    %2316 = vmatprep.subr.bf16.mxu0 0
    %2317 = vmatpush1.bf16.xpose.msra.mxu0 0
    %2318 = vmatprep.subr.bf16.mxu0 0
    %2319 = vmatpush1.bf16.xpose.msra.mxu0 0
    %2320 = vmatprep.subr.bf16.mxu0 0
    %2321 = vmatpush1.bf16.xpose.msra.mxu0 0
    %2322 = vmatprep.subr.bf16.mxu0 0
    %2323 = vmatpush1.bf16.xpose.msra.mxu0 0
    %2324 = vmatprep.subr.bf16.mxu0 0
    %2325 = vmatpush1.bf16.xpose.msra.mxu0 0
    %2326 = vmatprep.subr.bf16.mxu0 0
    %2327 = vmatpush1.bf16.xpose.msra.mxu0 0
    %2328 = vmatprep.mubr.bf16.mxu0 0
    %2329 = vmatmul.mubr.bf16.gmra.mrb[0].mxu0 %v2291
    %v2330 = vpop.f32.mrb[0].mxu0
    %v2331 = vadd.f32 0.0, %v2330
    %v2332 = vpop.f32.mrb[0].mxu0
    %v2333 = vpop.f32.mrb[0].mxu0
    %v2334 = vpop.f32.mrb[0].mxu0
    %2335 = vdwg.mxu0
    %v2337 = vsel %vm1567, %v2283, 0
    %v2340 = vsel %vm1567, %v1657, 0
    %2342 = vmatprep.subr.bf16.mxu0 0
    %2343 = vmatpush1.bf16.xpose.msra.mxu0 %v2340
    %2344 = vmatprep.subr.bf16.mxu0 0
    %2345 = vmatpush1.bf16.xpose.msra.mxu0 0
    %2346 = vmatprep.subr.bf16.mxu0 0
    %2347 = vmatpush1.bf16.xpose.msra.mxu0 0
    %2348 = vmatprep.subr.bf16.mxu0 0
    %2349 = vmatpush1.bf16.xpose.msra.mxu0 0
    %2350 = vmatprep.subr.bf16.mxu0 0
    %2351 = vmatpush1.bf16.xpose.msra.mxu0 0
    %2352 = vmatprep.subr.bf16.mxu0 0
    %2353 = vmatpush1.bf16.xpose.msra.mxu0 0
    %2354 = vmatprep.subr.bf16.mxu0 0
    %2355 = vmatpush1.bf16.xpose.msra.mxu0 0
    %2356 = vmatprep.subr.bf16.mxu0 0
    %2357 = vmatpush1.bf16.xpose.msra.mxu0 0
    %2358 = vmatprep.subr.bf16.mxu0 0
    %2359 = vmatpush1.bf16.xpose.msra.mxu0 0
    %2360 = vmatprep.subr.bf16.mxu0 0
    %2361 = vmatpush1.bf16.xpose.msra.mxu0 0
    %2362 = vmatprep.subr.bf16.mxu0 0
    %2363 = vmatpush1.bf16.xpose.msra.mxu0 0
    %2364 = vmatprep.subr.bf16.mxu0 0
    %2365 = vmatpush1.bf16.xpose.msra.mxu0 0
    %2366 = vmatprep.subr.bf16.mxu0 0
    %2367 = vmatpush1.bf16.xpose.msra.mxu0 0
    %2368 = vmatprep.subr.bf16.mxu0 0
    %2369 = vmatpush1.bf16.xpose.msra.mxu0 0
    %2370 = vmatprep.subr.bf16.mxu0 0
    %2371 = vmatpush1.bf16.xpose.msra.mxu0 0
    %2372 = vmatprep.subr.bf16.mxu0 0
    %2373 = vmatpush1.bf16.xpose.msra.mxu0 0
    %2374 = vmatprep.mubr.bf16.mxu0 0
    %2375 = vmatmul.mubr.bf16.gmra.mrb[0].mxu0 %v2337
    %v2376 = vpop.f32.mrb[0].mxu0
    %v2377 = vadd.f32 0.0, %v2376
    %v2378 = vpop.f32.mrb[0].mxu0
    %v2379 = vpop.f32.mrb[0].mxu0
    %v2380 = vpop.f32.mrb[0].mxu0
    %2381 = vdwg.mxu0
    %v2383 = vsel %vm1567, %v2286, 0
    %v2386 = vsel %vm1567, %v1658, 0
    %2388 = vmatprep.subr.bf16.mxu0 0
    %2389 = vmatpush1.bf16.xpose.msra.mxu0 %v2386
    %2390 = vmatprep.subr.bf16.mxu0 0
    %2391 = vmatpush1.bf16.xpose.msra.mxu0 0
    %2392 = vmatprep.subr.bf16.mxu0 0
    %2393 = vmatpush1.bf16.xpose.msra.mxu0 0
    %2394 = vmatprep.subr.bf16.mxu0 0
    %2395 = vmatpush1.bf16.xpose.msra.mxu0 0
    %2396 = vmatprep.subr.bf16.mxu0 0
    %2397 = vmatpush1.bf16.xpose.msra.mxu0 0
    %2398 = vmatprep.subr.bf16.mxu0 0
    %2399 = vmatpush1.bf16.xpose.msra.mxu0 0
    %2400 = vmatprep.subr.bf16.mxu0 0
    %2401 = vmatpush1.bf16.xpose.msra.mxu0 0
    %2402 = vmatprep.subr.bf16.mxu0 0
    %2403 = vmatpush1.bf16.xpose.msra.mxu0 0
    %2404 = vmatprep.subr.bf16.mxu0 0
    %2405 = vmatpush1.bf16.xpose.msra.mxu0 0
    %2406 = vmatprep.subr.bf16.mxu0 0
    %2407 = vmatpush1.bf16.xpose.msra.mxu0 0
    %2408 = vmatprep.subr.bf16.mxu0 0
    %2409 = vmatpush1.bf16.xpose.msra.mxu0 0
    %2410 = vmatprep.subr.bf16.mxu0 0
    %2411 = vmatpush1.bf16.xpose.msra.mxu0 0
    %2412 = vmatprep.subr.bf16.mxu0 0
    %2413 = vmatpush1.bf16.xpose.msra.mxu0 0
    %2414 = vmatprep.subr.bf16.mxu0 0
    %2415 = vmatpush1.bf16.xpose.msra.mxu0 0
    %2416 = vmatprep.subr.bf16.mxu0 0
    %2417 = vmatpush1.bf16.xpose.msra.mxu0 0
    %2418 = vmatprep.subr.bf16.mxu0 0
    %2419 = vmatpush1.bf16.xpose.msra.mxu0 0
    %2420 = vmatprep.mubr.bf16.mxu0 0
    %2421 = vmatmul.mubr.bf16.gmra.mrb[0].mxu0 %v2383
    %v2422 = vpop.f32.mrb[0].mxu0
    %v2423 = vadd.f32 0.0, %v2422
    %v2424 = vpop.f32.mrb[0].mxu0
    %v2425 = vpop.f32.mrb[0].mxu0
    %v2426 = vpop.f32.mrb[0].mxu0
    %2427 = vdwg.mxu0
    %v2429 = vsel %vm1567, %v2289, 0
    %v2432 = vsel %vm1567, %v1659, 0
    %2434 = vmatprep.subr.bf16.mxu0 0
    %2435 = vmatpush1.bf16.xpose.msra.mxu0 %v2432
    %2436 = vmatprep.subr.bf16.mxu0 0
    %2437 = vmatpush1.bf16.xpose.msra.mxu0 0
    %2438 = vmatprep.subr.bf16.mxu0 0
    %2439 = vmatpush1.bf16.xpose.msra.mxu0 0
    %2440 = vmatprep.subr.bf16.mxu0 0
    %2441 = vmatpush1.bf16.xpose.msra.mxu0 0
    %2442 = vmatprep.subr.bf16.mxu0 0
    %2443 = vmatpush1.bf16.xpose.msra.mxu0 0
    %2444 = vmatprep.subr.bf16.mxu0 0
    %2445 = vmatpush1.bf16.xpose.msra.mxu0 0
    %2446 = vmatprep.subr.bf16.mxu0 0
    %2447 = vmatpush1.bf16.xpose.msra.mxu0 0
    %2448 = vmatprep.subr.bf16.mxu0 0
    %2449 = vmatpush1.bf16.xpose.msra.mxu0 0
    %2450 = vmatprep.subr.bf16.mxu0 0
    %2451 = vmatpush1.bf16.xpose.msra.mxu0 0
    %2452 = vmatprep.subr.bf16.mxu0 0
    %2453 = vmatpush1.bf16.xpose.msra.mxu0 0
    %2454 = vmatprep.subr.bf16.mxu0 0
    %2455 = vmatpush1.bf16.xpose.msra.mxu0 0
    %2456 = vmatprep.subr.bf16.mxu0 0
    %2457 = vmatpush1.bf16.xpose.msra.mxu0 0
    %2458 = vmatprep.subr.bf16.mxu0 0
    %2459 = vmatpush1.bf16.xpose.msra.mxu0 0
    %2460 = vmatprep.subr.bf16.mxu0 0
    %2461 = vmatpush1.bf16.xpose.msra.mxu0 0
    %2462 = vmatprep.subr.bf16.mxu0 0
    %2463 = vmatpush1.bf16.xpose.msra.mxu0 0
    %2464 = vmatprep.subr.bf16.mxu0 0
    %2465 = vmatpush1.bf16.xpose.msra.mxu0 0
    %2466 = vmatprep.mubr.bf16.mxu0 0
    %2467 = vmatmul.mubr.bf16.gmra.mrb[0].mxu0 %v2429
    %v2468 = vpop.f32.mrb[0].mxu0
    %v2469 = vadd.f32 0.0, %v2468
    %v2470 = vpop.f32.mrb[0].mxu0
    %v2471 = vpop.f32.mrb[0].mxu0
    %v2472 = vpop.f32.mrb[0].mxu0
    %2473 = vdwg.mxu0
    %2474 = vxpose.xlu0.b32.start [1/16] %v2331, 128
    %2475 = vxpose.xlu0.b32.cont [2/16] 0.0, 128
    %2476 = vxpose.xlu0.b32.cont [3/16] 0.0, 128
    %2477 = vxpose.xlu0.b32.cont [4/16] 0.0, 128
    %2478 = vxpose.xlu0.b32.cont [5/16] 0.0, 128
    %2479 = vxpose.xlu0.b32.cont [6/16] 0.0, 128
    %2480 = vxpose.xlu0.b32.cont [7/16] 0.0, 128
    %2481 = vxpose.xlu0.b32.cont [8/16] 0.0, 128
    %2482 = vxpose.xlu0.b32.cont [9/16] 0.0, 128
    %2483 = vxpose.xlu0.b32.cont [10/16] 0.0, 128
    %2484 = vxpose.xlu0.b32.cont [11/16] 0.0, 128
    %2485 = vxpose.xlu0.b32.cont [12/16] 0.0, 128
    %2486 = vxpose.xlu0.b32.cont [13/16] 0.0, 128
    %2487 = vxpose.xlu0.b32.cont [14/16] 0.0, 128
    %2488 = vxpose.xlu0.b32.cont [15/16] 0.0, 128
    %2489 = vxpose.xlu0.b32.end [16/16] 0.0, 128
    %v2490 = vpop.trf.xlu0
    %v2491 = vpop.trf.xlu0
    %v2492 = vpop.trf.xlu0
    %v2493 = vpop.trf.xlu0
    %v2494 = vpop.trf.xlu0
    %v2495 = vpop.trf.xlu0
    %v2496 = vpop.trf.xlu0
    %v2497 = vpop.trf.xlu0
    %v2498 = vpop.trf.xlu0
    %v2499 = vpop.trf.xlu0
    %v2500 = vpop.trf.xlu0
    %v2501 = vpop.trf.xlu0
    %v2502 = vpop.trf.xlu0
    %v2503 = vpop.trf.xlu0
    %v2504 = vpop.trf.xlu0
    %v2505 = vpop.trf.xlu0
    %2506 = vxpose.xlu0.b32.start [1/16] %v2377, 128
    %2507 = vxpose.xlu0.b32.cont [2/16] 0.0, 128
    %2508 = vxpose.xlu0.b32.cont [3/16] 0.0, 128
    %2509 = vxpose.xlu0.b32.cont [4/16] 0.0, 128
    %2510 = vxpose.xlu0.b32.cont [5/16] 0.0, 128
    %2511 = vxpose.xlu0.b32.cont [6/16] 0.0, 128
    %2512 = vxpose.xlu0.b32.cont [7/16] 0.0, 128
    %2513 = vxpose.xlu0.b32.cont [8/16] 0.0, 128
    %2514 = vxpose.xlu0.b32.cont [9/16] 0.0, 128
    %2515 = vxpose.xlu0.b32.cont [10/16] 0.0, 128
    %2516 = vxpose.xlu0.b32.cont [11/16] 0.0, 128
    %2517 = vxpose.xlu0.b32.cont [12/16] 0.0, 128
    %2518 = vxpose.xlu0.b32.cont [13/16] 0.0, 128
    %2519 = vxpose.xlu0.b32.cont [14/16] 0.0, 128
    %2520 = vxpose.xlu0.b32.cont [15/16] 0.0, 128
    %2521 = vxpose.xlu0.b32.end [16/16] 0.0, 128
    %v2522 = vpop.trf.xlu0
    %v2523 = vpop.trf.xlu0
    %v2524 = vpop.trf.xlu0
    %v2525 = vpop.trf.xlu0
    %v2526 = vpop.trf.xlu0
    %v2527 = vpop.trf.xlu0
    %v2528 = vpop.trf.xlu0
    %v2529 = vpop.trf.xlu0
    %v2530 = vpop.trf.xlu0
    %v2531 = vpop.trf.xlu0
    %v2532 = vpop.trf.xlu0
    %v2533 = vpop.trf.xlu0
    %v2534 = vpop.trf.xlu0
    %v2535 = vpop.trf.xlu0
    %v2536 = vpop.trf.xlu0
    %v2537 = vpop.trf.xlu0
    %2538 = vxpose.xlu0.b32.start [1/16] %v2423, 128
    %2539 = vxpose.xlu0.b32.cont [2/16] 0.0, 128
    %2540 = vxpose.xlu0.b32.cont [3/16] 0.0, 128
    %2541 = vxpose.xlu0.b32.cont [4/16] 0.0, 128
    %2542 = vxpose.xlu0.b32.cont [5/16] 0.0, 128
    %2543 = vxpose.xlu0.b32.cont [6/16] 0.0, 128
    %2544 = vxpose.xlu0.b32.cont [7/16] 0.0, 128
    %2545 = vxpose.xlu0.b32.cont [8/16] 0.0, 128
    %2546 = vxpose.xlu0.b32.cont [9/16] 0.0, 128
    %2547 = vxpose.xlu0.b32.cont [10/16] 0.0, 128
    %2548 = vxpose.xlu0.b32.cont [11/16] 0.0, 128
    %2549 = vxpose.xlu0.b32.cont [12/16] 0.0, 128
    %2550 = vxpose.xlu0.b32.cont [13/16] 0.0, 128
    %2551 = vxpose.xlu0.b32.cont [14/16] 0.0, 128
    %2552 = vxpose.xlu0.b32.cont [15/16] 0.0, 128
    %2553 = vxpose.xlu0.b32.end [16/16] 0.0, 128
    %v2554 = vpop.trf.xlu0
    %v2555 = vpop.trf.xlu0
    %v2556 = vpop.trf.xlu0
    %v2557 = vpop.trf.xlu0
    %v2558 = vpop.trf.xlu0
    %v2559 = vpop.trf.xlu0
    %v2560 = vpop.trf.xlu0
    %v2561 = vpop.trf.xlu0
    %v2562 = vpop.trf.xlu0
    %v2563 = vpop.trf.xlu0
    %v2564 = vpop.trf.xlu0
    %v2565 = vpop.trf.xlu0
    %v2566 = vpop.trf.xlu0
    %v2567 = vpop.trf.xlu0
    %v2568 = vpop.trf.xlu0
    %v2569 = vpop.trf.xlu0
    %2570 = vxpose.xlu0.b32.start [1/16] %v2469, 128
    %2571 = vxpose.xlu0.b32.cont [2/16] 0.0, 128
    %2572 = vxpose.xlu0.b32.cont [3/16] 0.0, 128
    %2573 = vxpose.xlu0.b32.cont [4/16] 0.0, 128
    %2574 = vxpose.xlu0.b32.cont [5/16] 0.0, 128
    %2575 = vxpose.xlu0.b32.cont [6/16] 0.0, 128
    %2576 = vxpose.xlu0.b32.cont [7/16] 0.0, 128
    %2577 = vxpose.xlu0.b32.cont [8/16] 0.0, 128
    %2578 = vxpose.xlu0.b32.cont [9/16] 0.0, 128
    %2579 = vxpose.xlu0.b32.cont [10/16] 0.0, 128
    %2580 = vxpose.xlu0.b32.cont [11/16] 0.0, 128
    %2581 = vxpose.xlu0.b32.cont [12/16] 0.0, 128
    %2582 = vxpose.xlu0.b32.cont [13/16] 0.0, 128
    %2583 = vxpose.xlu0.b32.cont [14/16] 0.0, 128
    %2584 = vxpose.xlu0.b32.cont [15/16] 0.0, 128
    %2585 = vxpose.xlu0.b32.end [16/16] 0.0, 128
    %v2586 = vpop.trf.xlu0
    %v2587 = vpop.trf.xlu0
    %v2588 = vpop.trf.xlu0
    %v2589 = vpop.trf.xlu0
    %v2590 = vpop.trf.xlu0
    %v2591 = vpop.trf.xlu0
    %v2592 = vpop.trf.xlu0
    %v2593 = vpop.trf.xlu0
    %v2594 = vpop.trf.xlu0
    %v2595 = vpop.trf.xlu0
    %v2596 = vpop.trf.xlu0
    %v2597 = vpop.trf.xlu0
    %v2598 = vpop.trf.xlu0
    %v2599 = vpop.trf.xlu0
    %v2600 = vpop.trf.xlu0
    %v2601 = vpop.trf.xlu0
    %v2602 = vcombine.low %v2490, %v2554
    %v2603 = vcombine.high %v2490, %v2554
    %v2605 = vunpack.c.l.s4 1983009808
    %v2606 = vunpack.c.0.s8 %v2605
    %v2607 = vlaneseq
    %v2608 = vshrl.u32 %v2607, 7
    %v2609 = vsub.s32 %v2606, %v2608
    %v2610 = vrot.slane %v2602, %v2609
    %v2612 = vunpack.c.l.s4 1983009808
    %v2613 = vunpack.c.0.s8 %v2612
    %v2614 = vlaneseq
    %v2615 = vshrl.u32 %v2614, 7
    %v2616 = vsub.s32 %v2613, %v2615
    %v2617 = vrot.slane %v2603, %v2616
    %v2618 = vcombine.low %v2522, %v2586
    %v2619 = vcombine.high %v2522, %v2586
    %v2621 = vunpack.c.l.s4 1983009808
    %v2622 = vunpack.c.0.s8 %v2621
    %v2623 = vlaneseq
    %v2624 = vshrl.u32 %v2623, 7
    %v2625 = vsub.s32 %v2622, %v2624
    %v2626 = vrot.slane %v2618, %v2625
    %v2628 = vunpack.c.l.s4 1983009808
    %v2629 = vunpack.c.0.s8 %v2628
    %v2630 = vlaneseq
    %v2631 = vshrl.u32 %v2630, 7
    %v2632 = vsub.s32 %v2629, %v2631
    %v2633 = vrot.slane %v2619, %v2632
    %v2634 = vcombine.low %v2610, %v2626
    %v2635 = vcombine.high %v2610, %v2626
    %v2637 = vunpack.c.l.s4 1934713408
    %v2638 = vunpack.c.0.s8 %v2637
    %v2639 = vlaneseq
    %v2640 = vshrl.u32 %v2639, 7
    %v2641 = vsub.s32 %v2638, %v2640
    %v2642 = vrot.slane %v2634, %v2641
    %v2644 = vunpack.c.l.s4 1934713408
    %v2645 = vunpack.c.0.s8 %v2644
    %v2646 = vlaneseq
    %v2647 = vshrl.u32 %v2646, 7
    %v2648 = vsub.s32 %v2645, %v2647
    %v2649 = vrot.slane %v2635, %v2648
    %v2650 = vcombine.low %v2617, %v2633
    %v2651 = vcombine.high %v2617, %v2633
    %v2653 = vunpack.c.l.s4 1934713408
    %v2654 = vunpack.c.0.s8 %v2653
    %v2655 = vlaneseq
    %v2656 = vshrl.u32 %v2655, 7
    %v2657 = vsub.s32 %v2654, %v2656
    %v2658 = vrot.slane %v2650, %v2657
    %v2660 = vunpack.c.l.s4 1934713408
    %v2661 = vunpack.c.0.s8 %v2660
    %v2662 = vlaneseq
    %v2663 = vshrl.u32 %v2662, 7
    %v2664 = vsub.s32 %v2661, %v2663
    %v2665 = vrot.slane %v2651, %v2664
    %v2666 = vcombine.high %v2642, 0.0
    %v2667 = vcombine.high %v2649, 0.0
    %v2668 = vcombine.high %v2658, 0.0
    %v2669 = vcombine.high %v2665, 0.0
    %v2670 = vcombine.low %v2491, %v2555
    %v2671 = vcombine.high %v2491, %v2555
    %v2673 = vunpack.c.l.s4 1983009808
    %v2674 = vunpack.c.0.s8 %v2673
    %v2675 = vlaneseq
    %v2676 = vshrl.u32 %v2675, 7
    %v2677 = vsub.s32 %v2674, %v2676
    %v2678 = vrot.slane %v2670, %v2677
    %v2680 = vunpack.c.l.s4 1983009808
    %v2681 = vunpack.c.0.s8 %v2680
    %v2682 = vlaneseq
    %v2683 = vshrl.u32 %v2682, 7
    %v2684 = vsub.s32 %v2681, %v2683
    %v2685 = vrot.slane %v2671, %v2684
    %v2686 = vcombine.low %v2523, %v2587
    %v2687 = vcombine.high %v2523, %v2587
    %v2689 = vunpack.c.l.s4 1983009808
    %v2690 = vunpack.c.0.s8 %v2689
    %v2691 = vlaneseq
    %v2692 = vshrl.u32 %v2691, 7
    %v2693 = vsub.s32 %v2690, %v2692
    %v2694 = vrot.slane %v2686, %v2693
    %v2696 = vunpack.c.l.s4 1983009808
    %v2697 = vunpack.c.0.s8 %v2696
    %v2698 = vlaneseq
    %v2699 = vshrl.u32 %v2698, 7
    %v2700 = vsub.s32 %v2697, %v2699
    %v2701 = vrot.slane %v2687, %v2700
    %v2702 = vcombine.low %v2678, %v2694
    %v2703 = vcombine.high %v2678, %v2694
    %v2705 = vunpack.c.l.s4 1934713408
    %v2706 = vunpack.c.0.s8 %v2705
    %v2707 = vlaneseq
    %v2708 = vshrl.u32 %v2707, 7
    %v2709 = vsub.s32 %v2706, %v2708
    %v2710 = vrot.slane %v2702, %v2709
    %v2712 = vunpack.c.l.s4 1934713408
    %v2713 = vunpack.c.0.s8 %v2712
    %v2714 = vlaneseq
    %v2715 = vshrl.u32 %v2714, 7
    %v2716 = vsub.s32 %v2713, %v2715
    %v2717 = vrot.slane %v2703, %v2716
    %v2718 = vcombine.low %v2685, %v2701
    %v2719 = vcombine.high %v2685, %v2701
    %v2721 = vunpack.c.l.s4 1934713408
    %v2722 = vunpack.c.0.s8 %v2721
    %v2723 = vlaneseq
    %v2724 = vshrl.u32 %v2723, 7
    %v2725 = vsub.s32 %v2722, %v2724
    %v2726 = vrot.slane %v2718, %v2725
    %v2728 = vunpack.c.l.s4 1934713408
    %v2729 = vunpack.c.0.s8 %v2728
    %v2730 = vlaneseq
    %v2731 = vshrl.u32 %v2730, 7
    %v2732 = vsub.s32 %v2729, %v2731
    %v2733 = vrot.slane %v2719, %v2732
    %v2734 = vcombine.high %v2710, 0.0
    %v2735 = vcombine.high %v2717, 0.0
    %v2736 = vcombine.high %v2726, 0.0
    %v2737 = vcombine.high %v2733, 0.0
    %v2738 = vcombine.low %v2642, %v2649
    %v2740 = vunpack.c.l.s4 1983009808
    %v2741 = vunpack.c.0.s8 %v2740
    %v2742 = vlaneseq
    %v2743 = vshrl.u32 %v2742, 7
    %v2744 = vsub.s32 %v2741, %v2743
    %v2745 = vrot.slane %v2738, %v2744
    %v2746 = vcombine.low %v2666, %v2667
    %v2748 = vunpack.c.l.s4 1983009808
    %v2749 = vunpack.c.0.s8 %v2748
    %v2750 = vlaneseq
    %v2751 = vshrl.u32 %v2750, 7
    %v2752 = vsub.s32 %v2749, %v2751
    %v2753 = vrot.slane %v2746, %v2752
    %v2754 = vcombine.low %v2658, %v2665
    %v2756 = vunpack.c.l.s4 1983009808
    %v2757 = vunpack.c.0.s8 %v2756
    %v2758 = vlaneseq
    %v2759 = vshrl.u32 %v2758, 7
    %v2760 = vsub.s32 %v2757, %v2759
    %v2761 = vrot.slane %v2754, %v2760
    %v2762 = vcombine.low %v2668, %v2669
    %v2764 = vunpack.c.l.s4 1983009808
    %v2765 = vunpack.c.0.s8 %v2764
    %v2766 = vlaneseq
    %v2767 = vshrl.u32 %v2766, 7
    %v2768 = vsub.s32 %v2765, %v2767
    %v2769 = vrot.slane %v2762, %v2768
    %v2770 = vcombine.low %v2745, %v2753
    %v2771 = vcombine.high %v2745, %v2753
    %v2773 = vunpack.c.l.s4 1934713408
    %v2774 = vunpack.c.0.s8 %v2773
    %v2775 = vlaneseq
    %v2776 = vshrl.u32 %v2775, 7
    %v2777 = vsub.s32 %v2774, %v2776
    %v2778 = vrot.slane %v2770, %v2777
    %v2780 = vunpack.c.l.s4 1934713408
    %v2781 = vunpack.c.0.s8 %v2780
    %v2782 = vlaneseq
    %v2783 = vshrl.u32 %v2782, 7
    %v2784 = vsub.s32 %v2781, %v2783
    %v2785 = vrot.slane %v2771, %v2784
    %v2786 = vcombine.low %v2761, %v2769
    %v2787 = vcombine.high %v2761, %v2769
    %v2789 = vunpack.c.l.s4 1934713408
    %v2790 = vunpack.c.0.s8 %v2789
    %v2791 = vlaneseq
    %v2792 = vshrl.u32 %v2791, 7
    %v2793 = vsub.s32 %v2790, %v2792
    %v2794 = vrot.slane %v2786, %v2793
    %v2796 = vunpack.c.l.s4 1934713408
    %v2797 = vunpack.c.0.s8 %v2796
    %v2798 = vlaneseq
    %v2799 = vshrl.u32 %v2798, 7
    %v2800 = vsub.s32 %v2797, %v2799
    %v2801 = vrot.slane %v2787, %v2800
    %v2802 = vcombine.low %v2778, %v2794
    %v2803 = vcombine.high %v2778, %v2794
    %v2804 = vcombine.low %v2785, %v2801
    %v2805 = vcombine.high %v2785, %v2801
    %v2806 = vcombine.low %v2710, %v2717
    %v2808 = vunpack.c.l.s4 1983009808
    %v2809 = vunpack.c.0.s8 %v2808
    %v2810 = vlaneseq
    %v2811 = vshrl.u32 %v2810, 7
    %v2812 = vsub.s32 %v2809, %v2811
    %v2813 = vrot.slane %v2806, %v2812
    %v2814 = vcombine.low %v2734, %v2735
    %v2816 = vunpack.c.l.s4 1983009808
    %v2817 = vunpack.c.0.s8 %v2816
    %v2818 = vlaneseq
    %v2819 = vshrl.u32 %v2818, 7
    %v2820 = vsub.s32 %v2817, %v2819
    %v2821 = vrot.slane %v2814, %v2820
    %v2822 = vcombine.low %v2726, %v2733
    %v2824 = vunpack.c.l.s4 1983009808
    %v2825 = vunpack.c.0.s8 %v2824
    %v2826 = vlaneseq
    %v2827 = vshrl.u32 %v2826, 7
    %v2828 = vsub.s32 %v2825, %v2827
    %v2829 = vrot.slane %v2822, %v2828
    %v2830 = vcombine.low %v2736, %v2737
    %v2832 = vunpack.c.l.s4 1983009808
    %v2833 = vunpack.c.0.s8 %v2832
    %v2834 = vlaneseq
    %v2835 = vshrl.u32 %v2834, 7
    %v2836 = vsub.s32 %v2833, %v2835
    %v2837 = vrot.slane %v2830, %v2836
    %v2838 = vcombine.low %v2813, %v2821
    %v2839 = vcombine.high %v2813, %v2821
    %v2841 = vunpack.c.l.s4 1934713408
    %v2842 = vunpack.c.0.s8 %v2841
    %v2843 = vlaneseq
    %v2844 = vshrl.u32 %v2843, 7
    %v2845 = vsub.s32 %v2842, %v2844
    %v2846 = vrot.slane %v2838, %v2845
    %v2848 = vunpack.c.l.s4 1934713408
    %v2849 = vunpack.c.0.s8 %v2848
    %v2850 = vlaneseq
    %v2851 = vshrl.u32 %v2850, 7
    %v2852 = vsub.s32 %v2849, %v2851
    %v2853 = vrot.slane %v2839, %v2852
    %v2854 = vcombine.low %v2829, %v2837
    %v2855 = vcombine.high %v2829, %v2837
    %v2857 = vunpack.c.l.s4 1934713408
    %v2858 = vunpack.c.0.s8 %v2857
    %v2859 = vlaneseq
    %v2860 = vshrl.u32 %v2859, 7
    %v2861 = vsub.s32 %v2858, %v2860
    %v2862 = vrot.slane %v2854, %v2861
    %v2864 = vunpack.c.l.s4 1934713408
    %v2865 = vunpack.c.0.s8 %v2864
    %v2866 = vlaneseq
    %v2867 = vshrl.u32 %v2866, 7
    %v2868 = vsub.s32 %v2865, %v2867
    %v2869 = vrot.slane %v2855, %v2868
    %v2870 = vcombine.low %v2846, %v2862
    %v2871 = vcombine.high %v2846, %v2862
    %v2872 = vcombine.low %v2853, %v2869
    %v2873 = vcombine.high %v2853, %v2869
    %2876 = vrot.lane.b32.xlu0 %v2803, 8
    %v2877 = vpop.permute.xlu0 %2876
    %2878 = vrot.lane.b32.xlu0 %v2871, 8
    %v2879 = vpop.permute.xlu0 %2878
    %2884 = vrot.lane.b32.xlu0 %v2804, 16
    %v2885 = vpop.permute.xlu0 %2884
    %2886 = vrot.lane.b32.xlu0 %v2872, 16
    %v2887 = vpop.permute.xlu0 %2886
    %2892 = vrot.lane.b32.xlu0 %v2805, 24
    %v2893 = vpop.permute.xlu0 %2892
    %2894 = vrot.lane.b32.xlu0 %v2873, 24
    %v2895 = vpop.permute.xlu0 %2894
    %v2898 = vsel %vm1377, %v2802, %v2877
    %v2899 = vsel %vm1377, %v2870, %v2879
    %v2900 = vsel %vm1567, %v2898, %v2885
    %v2901 = vsel %vm1567, %v2899, %v2887
    %vm2902 = vcmask 195584
    %v2903 = vsel %vm2902, %v2900, %v2893
    %v2904 = vsel %vm2902, %v2901, %v2895
    %v2905 = vpack.c.bf16 %v2904, %v2903
    %v2906 = vld [vmem:[#allocation7] sm:$0xf]
    %v2907 = vld [vmem:[#allocation7 + $0x4] sm:$0xf]
    %v2908 = vld [vmem:[#allocation7 + $0x8] sm:$0xf]
    %v2909 = vld [vmem:[#allocation7 + $0xc] sm:$0xf]
    %v2910 = vld [vmem:[%s3] sm:$0x1]
    %v2912 = vlaneseq
    %v2913 = vshrl.u32 %v2912, 7
    %v2914 = vsub.s32 0, %v2913
    %v2915 = vrot.slane %v2910, %v2914
    %v2921 = vunpack.c.l.b16 %v2906
    %v2922 = vunpack.c.l.b16 %v2907
    %v2923 = vunpack.c.l.b16 %v2908
    %v2924 = vunpack.c.l.b16 %v2909
    %v2925 = vpack.c.b16 %v2922, %v2921
    %v2926 = vpack.c.b16 %v2924, %v2923
    %v2930 = vsel %vm96, %v2905, 0
    %2932 = vmatprep.subr.bf16.mxu0 0
    %2933 = vmatpush1.bf16.msra.mxu0 %v2925
    %2934 = vmatprep.subr.bf16.mxu0 0
    %2935 = vmatpush1.bf16.msra.mxu0 %v2926
    %2936 = vmatprep.subr.bf16.mxu0 0
    %2937 = vmatpush1.bf16.msra.mxu0 0
    %2938 = vmatprep.subr.bf16.mxu0 0
    %2939 = vmatpush1.bf16.msra.mxu0 0
    %2940 = vmatprep.subr.bf16.mxu0 0
    %2941 = vmatpush1.bf16.msra.mxu0 0
    %2942 = vmatprep.subr.bf16.mxu0 0
    %2943 = vmatpush1.bf16.msra.mxu0 0
    %2944 = vmatprep.subr.bf16.mxu0 0
    %2945 = vmatpush1.bf16.msra.mxu0 0
    %2946 = vmatprep.subr.bf16.mxu0 0
    %2947 = vmatpush1.bf16.msra.mxu0 0
    %2948 = vmatprep.subr.bf16.mxu0 0
    %2949 = vmatpush1.bf16.msra.mxu0 0
    %2950 = vmatprep.subr.bf16.mxu0 0
    %2951 = vmatpush1.bf16.msra.mxu0 0
    %2952 = vmatprep.subr.bf16.mxu0 0
    %2953 = vmatpush1.bf16.msra.mxu0 0
    %2954 = vmatprep.subr.bf16.mxu0 0
    %2955 = vmatpush1.bf16.msra.mxu0 0
    %2956 = vmatprep.subr.bf16.mxu0 0
    %2957 = vmatpush1.bf16.msra.mxu0 0
    %2958 = vmatprep.subr.bf16.mxu0 0
    %2959 = vmatpush1.bf16.msra.mxu0 0
    %2960 = vmatprep.subr.bf16.mxu0 0
    %2961 = vmatpush1.bf16.msra.mxu0 0
    %2962 = vmatprep.subr.bf16.mxu0 0
    %2963 = vmatpush1.bf16.msra.mxu0 0
    %2964 = vmatprep.mubr.bf16.mxu0 0
    %2965 = vmatmul.mubr.bf16.gmra.mrb[0].mxu0 %v2930
    %v2966 = vpop.f32.mrb[0].mxu0
    %v2967 = vadd.f32 %v2915, %v2966
    %v2968 = vpop.f32.mrb[0].mxu0
    %v2969 = vpop.f32.mrb[0].mxu0
    %v2970 = vadd.f32 %v2915, %v2969
    %v2971 = vpop.f32.mrb[0].mxu0
    %2972 = vdwg.mxu0
    %2973 = vst.msk [vmem:[#allocation10] sm:$0xff] %vm96, %v2967
    %2974 = vst.msk [vmem:[#allocation10 + $0x8] sm:$0xff] %vm96, %v2970
    // Predicated region
    $region38: #{tpu_custom_call.1} parent=1 // pred_check
      _
    $region39: #{tpu_custom_call.1} parent=1 // pred_check_branch
      %2976 = sbr.rel (0) target = $region41
    $region40: #{tpu_custom_call.1} parent=1 // pred_region
      %s2978 = ssub.s32 256, 256
      %2979 = vsyncadd [#allocation4], %s2978
      %s2980 = sshll.u32 [#allocation10], 4
      %s2981 = int_to_ptr.vmem [resolvable:$true] %s2980
      %2986 = dma.vmem_to_hbm [thread:$0]  %s2981, 256, %s5, [#allocation4], 128, 128, 8
    $region41: #{tpu_custom_call.1} parent=1 // pred_fallthru
      _
    // Predicated region
    $region42: #{tpu_custom_call.1} parent=1 // pred_check
      _
    $region43: #{tpu_custom_call.1} parent=1 // pred_check_branch
      %2988 = sbr.rel (0) target = $region45
    $region44: #{tpu_custom_call.1} parent=1 // pred_region
      %2989 = dma.done [#allocation4], 256
    $region45: #{tpu_custom_call.1} parent=1 // pred_fallthru
      _
    %2990 = vsyncpa [#allocation3], 1
    %2991 = vsyncpa [#allocation6], 1
    %2992 = vsyncpa [#allocation9], 1
    %2993 = vsyncpa [#allocation4], 1

</llo_original>
